<compile_context>
chip_gen: v6e
topology: v6e:2x2x1
jax: 0.10.0
libtpu: 0.0.40
codegen_flags: <defaults>
</compile_context>

<pallas_src>
import functools

import numpy as np
import jax
import jax.numpy as jnp
from jax import lax
from jax.experimental import pallas as pl
from jax.experimental.pallas import tpu as pltpu

EPS = 1e-15


def _diffpool_kernel(x_ref, adj_ref, mask_ref, w_ref, b_ref,
                     outx_ref, outadj_ref, loss_ref, *, binary_adj):
    f32 = jnp.float32
    x = x_ref[...]                                   # [BB, N, F] f32
    adj = adj_ref[...].astype(jnp.bfloat16)          # [BB, N, N] bf16 (0/1 exact)
    mask = mask_ref[...]                             # [BB, N, 1] f32
    w_cat = w_ref[...]                               # [2F, C] = [w_rel ; w_root]
    b_rel = b_ref[...]                               # [1, C]

    BB, N, F = x.shape
    C = w_cat.shape[1]

    # --- degrees: exact (f32-accumulated) MXU matmul against a ones column ---
    ones_b = jnp.ones((BB, N, 1), jnp.bfloat16)
    deg = jnp.einsum('bnm,bmo->bno', adj, ones_b,
                     preferred_element_type=f32)                 # [BB, N, 1]
    inv_deg = pl.reciprocal(jnp.maximum(deg, 1.0), approx=True)  # EUP slot

    # --- DenseSAGEConv: mean aggregation (A @ X) * (1/deg) --------------------
    # adj stays bf16; the f32 x is split into bf16 hi/lo parts so the product
    # keeps ~f32 accuracy with two bf16 MXU passes (no f32 [N,N] buffer).
    x_hi = x.astype(jnp.bfloat16)
    x_lo = (x - x_hi.astype(f32)).astype(jnp.bfloat16)
    agg = (jnp.einsum('bnm,bmf->bnf', adj, x_hi, preferred_element_type=f32)
           + jnp.einsum('bnm,bmf->bnf', adj, x_lo, preferred_element_type=f32))
    agg = agg * inv_deg

    # fused node-wise linears: [agg | x] @ [w_rel ; w_root] + b_rel
    feat = jnp.concatenate([agg.reshape(BB * N, F), x.reshape(BB * N, F)],
                           axis=-1)                              # [BB*N, 2F]
    s_pre = jnp.dot(feat, w_cat, preferred_element_type=f32) + b_rel

    # --- dense_diff_pool: softmax assignment, masked --------------------------
    s_max = jnp.max(s_pre, axis=-1, keepdims=True)
    e = jnp.exp(s_pre - s_max)
    s = e * pl.reciprocal(jnp.sum(e, axis=-1, keepdims=True), approx=True)
    s_m = s.reshape(BB, N, C) * mask     # masking S alone kills padded nodes

    # pooled features S^T X (raw x: masked S already zeroes padded rows)
    outx_ref[...] = jnp.einsum('bnc,bnf->bcf', s_m, x,
                               preferred_element_type=f32)       # [BB, C, F]

    # pooled adjacency S^T A S (adj stays bf16, hi/lo split on S)
    s_hi = s_m.astype(jnp.bfloat16)
    s_lo = (s_m - s_hi.astype(f32)).astype(jnp.bfloat16)
    sta = (jnp.einsum('bnc,bnm->bcm', s_hi, adj, preferred_element_type=f32)
           + jnp.einsum('bnc,bnm->bcm', s_lo, adj, preferred_element_type=f32))
    out_adj = jnp.einsum('bcm,bmk->bck', sta, s_m,
                         preferred_element_type=f32)             # [BB, C, C]
    outadj_ref[...] = out_adj

    # --- loss partials (merged into one tiny (1,1,2) output block) ------------
    # link: ||A - S S^T||_F^2 = ||A||_F^2 - 2 tr(S^T A S) + ||S^T S||_F^2
    if binary_adj:
        a_sq = jnp.sum(deg, keepdims=True)           # sum(A*A) == sum(A) for 0/1
    else:
        a_sq = jnp.sum(jnp.square(adj.astype(f32)), keepdims=True)
    rows = lax.broadcasted_iota(jnp.int32, (C, C), 0)
    cols = lax.broadcasted_iota(jnp.int32, (C, C), 1)
    diag = (rows == cols).astype(f32)                            # [C, C]
    tr = jnp.sum(out_adj * diag[None, :, :], keepdims=True)      # (1,1,1)
    sts = jnp.einsum('bnc,bnk->bck', s_m, s_m, preferred_element_type=f32)
    link_p = a_sq - 2.0 * tr + jnp.sum(sts * sts, keepdims=True)  # (1,1,1)
    ent_p = jnp.sum(-s_m * jnp.log(s_m + EPS), keepdims=True)     # (1,1,1)
    loss_ref[:, :, 0:1] = link_p
    loss_ref[:, :, 1:2] = ent_p


def _vmem_budget():
    """Per-step working-set budget + Mosaic scoped-VMEM limit from the chip."""
    try:
        cap = int(getattr(pltpu.get_tpu_info(), "vmem_capacity_bytes", 0))
    except Exception:
        cap = 0
    if cap <= 0:
        cap = 64 * 1024 * 1024          # conservative fallback (v7x per-core)
    budget = int(cap * 0.55)            # per-step set incl. double buffers
    limit = min(int(cap * 0.80), 100 * 1024 * 1024)
    return budget, limit


def _pick_batch_block(B, N, F, C, budget_bytes):
    """Largest divisor of B (capped at B//2 so the grid has >= 2 steps for the
    two v7x TensorCores) whose per-step working set fits the VMEM budget."""
    def est(bb):
        adj_in = 2 * bb * N * N * 1          # double-buffered int8 adj blocks
        adj_bf = bb * N * N * 2              # in-kernel bf16 adjacency
        x_in = 2 * bb * N * F * 4            # double-buffered f32 x blocks
        x_hilo = 2 * bb * N * F * 2          # bf16 hi/lo split of x
        msk = 2 * bb * N * 4
        inter = bb * N * (3 * F + 4 * C) * 4       # agg, [agg|x], s, s_m, ...
        small = bb * C * (2 * N + 3 * F + 6 * C) * 4  # sta, pooled outs (+bufs)
        return int(1.4 * (adj_in + adj_bf + x_in + x_hilo + msk + inter + small))
    cap = max(1, B // 2)
    best = 1
    for bb in range(1, cap + 1):
        if B % bb == 0 and est(bb) <= budget_bytes:
            best = bb
    return best


def diffpool_pallas(dense_x, dense_adj, mask, w_rel, b_rel, w_root,
                    batch_block=None, assume_binary_adj=True):
    B, N, F = dense_x.shape
    C = w_rel.shape[1]

    # pad node dim to a multiple of 8 so reshapes / (8,128) tiling are no-ops;
    # padded nodes are masked out and contribute nothing.
    Np = max(8, ((N + 7) // 8) * 8)
    xp = dense_x.astype(jnp.float32)
    adjp = dense_adj.astype(jnp.float32)
    maskp = mask.astype(jnp.float32)
    if Np != N:
        xp = jnp.pad(xp, ((0, 0), (0, Np - N), (0, 0)))
        adjp = jnp.pad(adjp, ((0, 0), (0, Np - N), (0, Np - N)))
        maskp = jnp.pad(maskp, ((0, 0), (0, Np - N)))

    # Adjacency HBM stream: int8 for 0/1 graphs (4x smaller than f32), bf16
    # fallback (exact for integer edge counts <= 256).  The kernel upcasts the
    # tile once to bf16; it is never expanded to f32.
    # TODO(synk): on v7x, fp8 (e4m3) represents 0/1 exactly and is a native MXU
    # operand, which would remove the in-kernel upcast entirely.
    adj_in = (adjp.astype(jnp.int8) if assume_binary_adj
              else adjp.astype(jnp.bfloat16))
    mask3 = maskp.reshape(B, Np, 1)
    w_cat = jnp.concatenate([w_rel, w_root], axis=0).astype(jnp.float32)  # [2F,C]
    b2 = b_rel.reshape(1, C).astype(jnp.float32)

    budget, vmem_limit = _vmem_budget()
    if batch_block is None:
        batch_block = _pick_batch_block(B, Np, F, C, budget)
    BB = batch_block
    assert B % BB == 0, "batch_block must divide the batch size"
    nb = B // BB

    kernel = functools.partial(_diffpool_kernel, binary_adj=assume_binary_adj)

    # NOTE: for very large N the adjacency should additionally be tiled along
    # the node dim (trailing "arbitrary" grid axis with VMEM accumulators for
    # deg / S^T A S / loss partials under pl.when); threshold ~N=4096 on v7x's
    # 64 MiB VMEM vs ~5800+ on v5e/v6e.  Unnecessary at these shapes.
    new_x, new_adj, loss_parts = pl.pallas_call(
        kernel,
        grid=(nb,),
        in_specs=[
            pl.BlockSpec((BB, Np, F), lambda g: (g, 0, 0)),   # dense_x (f32)
            pl.BlockSpec((BB, Np, Np), lambda g: (g, 0, 0)),  # adjacency (i8/bf16)
            pl.BlockSpec((BB, Np, 1), lambda g: (g, 0, 0)),   # mask
            pl.BlockSpec((2 * F, C), lambda g: (0, 0)),       # [w_rel ; w_root]
            pl.BlockSpec((1, C), lambda g: (0, 0)),           # lin_rel bias
        ],
        out_specs=(
            pl.BlockSpec((BB, C, F), lambda g: (g, 0, 0)),
            pl.BlockSpec((BB, C, C), lambda g: (g, 0, 0)),
            pl.BlockSpec((1, 1, 2), lambda g: (g, 0, 0)),     # [link, ent] partials
        ),
        out_shape=(
            jax.ShapeDtypeStruct((B, C, F), jnp.float32),
            jax.ShapeDtypeStruct((B, C, C), jnp.float32),
            jax.ShapeDtypeStruct((nb, 1, 2), jnp.float32),
        ),
        compiler_params=pltpu.CompilerParams(
            dimension_semantics=("parallel",),    # batch blocks are independent
            vmem_limit_bytes=vmem_limit,
        ),
    )(xp, adj_in, mask3, w_cat, b2)

    # final scalar reductions (torch.norm over the full tensor / mean over B*N);
    # normalizers use the ORIGINAL (unpadded) N.
    link_loss = jnp.sqrt(jnp.maximum(jnp.sum(loss_parts[:, 0, 0]), 0.0)) / (B * N * N)
    ent_loss = jnp.sum(loss_parts[:, 0, 1]) / (B * N)
    return new_x, new_adj, link_loss, ent_loss


def _reference(dense_x, dense_adj, mask, w_rel, b_rel, w_root):
    """Full-f32 (precision=HIGHEST) reference of the PyTorch forward."""
    hp = jax.lax.Precision.HIGHEST
    deg = jnp.maximum(dense_adj.sum(-1, keepdims=True), 1.0)
    agg = jnp.einsum('bij,bjf->bif', dense_adj, dense_x, precision=hp) / deg
    s = (jnp.einsum('bnf,fc->bnc', agg, w_rel, precision=hp) + b_rel
         + jnp.einsum('bnf,fc->bnc', dense_x, w_root, precision=hp))
    s = jax.nn.softmax(s, axis=-1)
    m = mask[..., None]
    xm, sm = dense_x * m, s * m
    out_x = jnp.einsum('bnc,bnf->bcf', sm, xm, precision=hp)
    out_adj = jnp.einsum('bnc,bnm,bmk->bck', sm, dense_adj, sm, precision=hp)
    ss_t = jnp.einsum('bnc,bmc->bnm', sm, sm, precision=hp)
    link = jnp.sqrt(jnp.sum((dense_adj - ss_t) ** 2)) / dense_adj.size
    ent = jnp.mean(jnp.sum(-sm * jnp.log(sm + EPS), axis=-1))
    return out_x, out_adj, link, ent


if __name__ == "__main__":
    B, N, F, C = 2, 8, 32, 4   # B graphs, N nodes, in_features_node=F, num_clusters=C
    key = jax.random.PRNGKey(0)
    k1, k2, k3, k4 = jax.random.split(key, 4)

    # --- synthetic graph input (x, edge_index, batch) ---
    num_nodes = B * N
    x = jax.random.normal(k1, (num_nodes, F), dtype=jnp.float32)
    batch = jnp.repeat(jnp.arange(B, dtype=jnp.int32), N)
    src, dst = [], []
    for b in range(B):                       # bidirectional ring per graph
        for i in range(N):
            src += [b * N + i, b * N + (i + 1) % N]
            dst += [b * N + (i + 1) % N, b * N + i]
    edge_index = jnp.array([src, dst], dtype=jnp.int32)

    # --- glue: to_dense_batch / to_dense_adj (equal-sized, sorted batches) ---
    dense_x = x.reshape(B, N, F)
    mask = jnp.ones((B, N), dtype=jnp.float32)
    b_of_edge = batch[edge_index[0]]
    src_local = edge_index[0] - b_of_edge * N
    dst_local = edge_index[1] - b_of_edge * N
    dense_adj = jnp.zeros((B, N, N), jnp.float32).at[
        b_of_edge, src_local, dst_local].add(1.0)

    # --- deterministic parameters: DenseSAGEConv(F, C) ---
    w_rel = (jax.random.normal(k2, (F, C)) * 0.1).astype(jnp.float32)   # lin_rel.weight^T
    b_rel = (jax.random.normal(k3, (1, C)) * 0.1).astype(jnp.float32)   # lin_rel.bias
    w_root = (jax.random.normal(k4, (F, C)) * 0.1).astype(jnp.float32)  # lin_root.weight^T

    new_x, new_adj, link_loss, ent_loss = diffpool_pallas(
        dense_x, dense_adj, mask, w_rel, b_rel, w_root)
    jax.block_until_ready((new_x, new_adj, link_loss, ent_loss))

    # Correctness vs an exact-f32 reference.  Tolerances are sized for the
    # MXU's bf16-operand matmul passes at default precision (worst-case ~0.5%
    # relative Frobenius error); with multi-pass f32 matmuls the kernel agrees
    # to ~1e-4 or better.
    rx, radj, rlink, rent = _reference(dense_x, dense_adj, mask, w_rel, b_rel, w_root)

    def rel_err(a, b):
        a = np.asarray(a, np.float64)
        b = np.asarray(b, np.float64)
        return float(np.linalg.norm(a - b) / max(np.linalg.norm(b), 1e-12))

    assert rel_err(new_x, rx) < 2e-2
    assert rel_err(new_adj, radj) < 2e-2
    assert abs(float(link_loss) - float(rlink)) <= 2e-2 * abs(float(rlink)) + 1e-6
    assert abs(float(ent_loss) - float(rent)) <= 2e-2 * abs(float(rent)) + 1e-6

    # --- remaining forward glue (reshape / batch vector / dense_to_sparse) ---
    x_out = new_x.reshape(B * C, F)                        # [batch_num*node_num, F]
    batch_out = jnp.repeat(jnp.arange(B, dtype=jnp.int32), C)
    # TODO(synk): dense_to_sparse has a data-dependent (dynamic) output shape; no
    # clean Pallas/JAX static-shape equivalent, so it is done host-side with numpy.
    adj_np = np.asarray(new_adj)
    bb_, rr, cc = np.nonzero(adj_np)
    edge_index_out = np.stack([bb_ * C + rr, bb_ * C + cc], axis=0)

    jax.block_until_ready((x_out, batch_out))
    _ = (x_out, edge_index_out, batch_out, link_loss, ent_loss)
    print("KERNEL_OK")
</pallas_src>

<mosaic_0001>
module attributes {stable_mosaic.version = 11 : i64} {
  func.func @_diffpool_kernel(%arg0: i32, %arg1: memref<1x8x32xf32, #tpu.memory_space<vmem>>, %arg2: memref<1x8x8xi8, #tpu.memory_space<vmem>>, %arg3: memref<1x8x1xf32, #tpu.memory_space<vmem>>, %arg4: memref<64x4xf32, #tpu.memory_space<vmem>>, %arg5: memref<1x4xf32, #tpu.memory_space<vmem>>, %arg6: memref<1x4x32xf32, #tpu.memory_space<vmem>>, %arg7: memref<1x4x4xf32, #tpu.memory_space<vmem>>, %arg8: memref<1x1x2xf32, #tpu.memory_space<vmem>>) attributes {dimension_semantics = [#tpu.dimension_semantics<parallel>], iteration_bounds = array<i64: 2>, scalar_prefetch = 0 : i64, scratch_operands = 0 : i64, tpu.core_type = #tpu.core_type<tc>, window_params = [{transform_indices = @transform_0, window_bounds = array<i64: 1, 8, 32>}, {transform_indices = @transform_1, window_bounds = array<i64: 1, 8, 8>}, {transform_indices = @transform_2, window_bounds = array<i64: 1, 8, 1>}, {pipeline_mode = #tpu.pipeline_mode<synchronous>, transform_indices = @transform_3, window_bounds = array<i64: 64, 4>}, {pipeline_mode = #tpu.pipeline_mode<synchronous>, transform_indices = @transform_4, window_bounds = array<i64: 1, 4>}, {transform_indices = @transform_5, window_bounds = array<i64: 1, 4, 32>}, {transform_indices = @transform_6, window_bounds = array<i64: 1, 4, 4>}, {transform_indices = @transform_7, window_bounds = array<i64: 1, 1, 2>}]} {
    %c0 = arith.constant 0 : index
    %c0_0 = arith.constant 0 : index
    %c0_1 = arith.constant 0 : index
    %0 = vector.load %arg1[%c0, %c0_0, %c0_1] : memref<1x8x32xf32, #tpu.memory_space<vmem>>, vector<1x8x32xf32>
    %c0_2 = arith.constant 0 : index
    %c0_3 = arith.constant 0 : index
    %c0_4 = arith.constant 0 : index
    %1 = vector.load %arg2[%c0_2, %c0_3, %c0_4] : memref<1x8x8xi8, #tpu.memory_space<vmem>>, vector<1x8x8xi8>
    %2 = arith.sitofp %1 : vector<1x8x8xi8> to vector<1x8x8xbf16>
    %c0_5 = arith.constant 0 : index
    %c0_6 = arith.constant 0 : index
    %c0_7 = arith.constant 0 : index
    %3 = vector.load %arg3[%c0_5, %c0_6, %c0_7] : memref<1x8x1xf32, #tpu.memory_space<vmem>>, vector<1x8x1xf32>
    %c0_8 = arith.constant 0 : index
    %c0_9 = arith.constant 0 : index
    %4 = vector.load %arg4[%c0_8, %c0_9] : memref<64x4xf32, #tpu.memory_space<vmem>>, vector<64x4xf32>
    %c0_10 = arith.constant 0 : index
    %c0_11 = arith.constant 0 : index
    %5 = vector.load %arg5[%c0_10, %c0_11] : memref<1x4xf32, #tpu.memory_space<vmem>>, vector<1x4xf32>
    %cst = arith.constant 1.000000e+00 : bf16
    %6 = vector.broadcast %cst : bf16 to vector<1x8x1xbf16>
    "tpu.trace_start"() <{level = 10 : i32, message = "bnm,bmo->bno"}> : () -> ()
    %cst_12 = arith.constant dense<0.000000e+00> : vector<1x8x1xf32>
    %7 = tpu.matmul %2, %6, %cst_12 {dimension_numbers = #tpu.dot_dimension_numbers<[2], [1], [1], [2], [0, 0, 0, 1, 1, 2], [0], [0]>} : vector<1x8x8xbf16>, vector<1x8x1xbf16>, vector<1x8x1xf32> -> vector<1x8x1xf32>
    "tpu.trace_stop"() : () -> ()
    %cst_13 = arith.constant 1.000000e+00 : f32
    %8 = vector.broadcast %cst_13 : f32 to vector<1x8x1xf32>
    %9 = arith.maximumf %7, %8 : vector<1x8x1xf32>
    %10 = tpu.reciprocal %9 {approx = true} : vector<1x8x1xf32> -> vector<1x8x1xf32>
    %11 = arith.truncf %0 : vector<1x8x32xf32> to vector<1x8x32xbf16>
    %12 = arith.extf %11 : vector<1x8x32xbf16> to vector<1x8x32xf32>
    %13 = arith.subf %0, %12 : vector<1x8x32xf32>
    %14 = arith.truncf %13 : vector<1x8x32xf32> to vector<1x8x32xbf16>
    "tpu.trace_start"() <{level = 10 : i32, message = "bnm,bmf->bnf"}> : () -> ()
    %cst_14 = arith.constant dense<0.000000e+00> : vector<1x8x32xf32>
    %15 = tpu.matmul %2, %11, %cst_14 {dimension_numbers = #tpu.dot_dimension_numbers<[2], [1], [1], [2], [0, 0, 0, 1, 1, 2], [0], [0]>} : vector<1x8x8xbf16>, vector<1x8x32xbf16>, vector<1x8x32xf32> -> vector<1x8x32xf32>
    %cst_15 = arith.constant dense<0.000000e+00> : vector<1x8x32xf32>
    %16 = tpu.matmul %2, %14, %cst_15 {dimension_numbers = #tpu.dot_dimension_numbers<[2], [1], [1], [2], [0, 0, 0, 1, 1, 2], [0], [0]>} : vector<1x8x8xbf16>, vector<1x8x32xbf16>, vector<1x8x32xf32> -> vector<1x8x32xf32>
    "tpu.trace_stop"() : () -> ()
    %17 = arith.addf %15, %16 : vector<1x8x32xf32>
    %18 = vector.broadcast %10 : vector<1x8x1xf32> to vector<1x8x32xf32>
    %19 = arith.mulf %17, %18 : vector<1x8x32xf32>
    %20 = vector.shape_cast %19 : vector<1x8x32xf32> to vector<8x32xf32>
    %21 = vector.shape_cast %0 : vector<1x8x32xf32> to vector<8x32xf32>
    %22 = tpu.concatenate %20, %21 in 1 : vector<8x32xf32>, vector<8x32xf32> -> vector<8x64xf32>
    %cst_16 = arith.constant dense<0.000000e+00> : vector<8x4xf32>
    %23 = tpu.matmul %22, %4, %cst_16 {dimension_numbers = #tpu.dot_dimension_numbers<[1], [0], [0], [1], [0, 0, 1, 1], [], []>} : vector<8x64xf32>, vector<64x4xf32>, vector<8x4xf32> -> vector<8x4xf32>
    %24 = vector.broadcast %5 : vector<1x4xf32> to vector<8x4xf32>
    %25 = arith.addf %23, %24 : vector<8x4xf32>
    %cst_17 = arith.constant dense<0xFF800000> : vector<8xf32>
    %26 = vector.multi_reduction <maximumf>, %25, %cst_17 [1] : vector<8x4xf32> to vector<8xf32>
    %27 = vector.shape_cast %26 : vector<8xf32> to vector<8x1xf32>
    %28 = vector.broadcast %27 : vector<8x1xf32> to vector<8x4xf32>
    %29 = arith.subf %25, %28 : vector<8x4xf32>
    %30 = math.exp %29 : vector<8x4xf32>
    %cst_18 = arith.constant dense<0.000000e+00> : vector<8xf32>
    %31 = vector.multi_reduction <add>, %30, %cst_18 [1] : vector<8x4xf32> to vector<8xf32>
    %32 = vector.shape_cast %31 : vector<8xf32> to vector<8x1xf32>
    %33 = tpu.reciprocal %32 {approx = true} : vector<8x1xf32> -> vector<8x1xf32>
    %34 = vector.broadcast %33 : vector<8x1xf32> to vector<8x4xf32>
    %35 = arith.mulf %30, %34 : vector<8x4xf32>
    %36 = vector.shape_cast %35 : vector<8x4xf32> to vector<1x8x4xf32>
    %37 = vector.broadcast %3 : vector<1x8x1xf32> to vector<1x8x4xf32>
    %38 = arith.mulf %36, %37 : vector<1x8x4xf32>
    "tpu.trace_start"() <{level = 10 : i32, message = "bnc,bnf->bcf"}> : () -> ()
    %cst_19 = arith.constant dense<0.000000e+00> : vector<1x4x32xf32>
    %39 = tpu.matmul %38, %0, %cst_19 {dimension_numbers = #tpu.dot_dimension_numbers<[1], [1], [2], [2], [0, 0, 0, 2, 1, 2], [0], [0]>} : vector<1x8x4xf32>, vector<1x8x32xf32>, vector<1x4x32xf32> -> vector<1x4x32xf32>
    "tpu.trace_stop"() : () -> ()
    %c0_20 = arith.constant 0 : index
    %c0_21 = arith.constant 0 : index
    %c0_22 = arith.constant 0 : index
    %40 = vector.load %arg6[%c0_20, %c0_21, %c0_22] : memref<1x4x32xf32, #tpu.memory_space<vmem>>, vector<1x4x32xf32>
    tpu.vector_store %arg6[%c0_20, %c0_21, %c0_22], %39 {strides = array<i32>} : memref<1x4x32xf32, #tpu.memory_space<vmem>>, vector<1x4x32xf32>,
    %41 = arith.truncf %38 : vector<1x8x4xf32> to vector<1x8x4xbf16>
    %42 = arith.extf %41 : vector<1x8x4xbf16> to vector<1x8x4xf32>
    %43 = arith.subf %38, %42 : vector<1x8x4xf32>
    %44 = arith.truncf %43 : vector<1x8x4xf32> to vector<1x8x4xbf16>
    "tpu.trace_start"() <{level = 10 : i32, message = "bnc,bnm->bcm"}> : () -> ()
    %cst_23 = arith.constant dense<0.000000e+00> : vector<1x4x8xf32>
    %45 = tpu.matmul %41, %2, %cst_23 {dimension_numbers = #tpu.dot_dimension_numbers<[1], [1], [2], [2], [0, 0, 0, 2, 1, 2], [0], [0]>} : vector<1x8x4xbf16>, vector<1x8x8xbf16>, vector<1x4x8xf32> -> vector<1x4x8xf32>
    %cst_24 = arith.constant dense<0.000000e+00> : vector<1x4x8xf32>
    %46 = tpu.matmul %44, %2, %cst_24 {dimension_numbers = #tpu.dot_dimension_numbers<[1], [1], [2], [2], [0, 0, 0, 2, 1, 2], [0], [0]>} : vector<1x8x4xbf16>, vector<1x8x8xbf16>, vector<1x4x8xf32> -> vector<1x4x8xf32>
    "tpu.trace_stop"() : () -> ()
    %47 = arith.addf %45, %46 : vector<1x4x8xf32>
    "tpu.trace_start"() <{level = 10 : i32, message = "bcm,bmk->bck"}> : () -> ()
    %cst_25 = arith.constant dense<0.000000e+00> : vector<1x4x4xf32>
    %48 = tpu.matmul %47, %38, %cst_25 {dimension_numbers = #tpu.dot_dimension_numbers<[2], [1], [1], [2], [0, 0, 0, 1, 1, 2], [0], [0]>} : vector<1x4x8xf32>, vector<1x8x4xf32>, vector<1x4x4xf32> -> vector<1x4x4xf32>
    "tpu.trace_stop"() : () -> ()
    %c0_26 = arith.constant 0 : index
    %c0_27 = arith.constant 0 : index
    %c0_28 = arith.constant 0 : index
    %49 = vector.load %arg7[%c0_26, %c0_27, %c0_28] : memref<1x4x4xf32, #tpu.memory_space<vmem>>, vector<1x4x4xf32>
    tpu.vector_store %arg7[%c0_26, %c0_27, %c0_28], %48 {strides = array<i32>} : memref<1x4x4xf32, #tpu.memory_space<vmem>>, vector<1x4x4xf32>,
    %50 = vector.shape_cast %7 : vector<1x8x1xf32> to vector<1x1x8x1xf32>
    %cst_29 = arith.constant dense<0.000000e+00> : vector<1xf32>
    %51 = vector.multi_reduction <add>, %50, %cst_29 [1, 2, 3] : vector<1x1x8x1xf32> to vector<1xf32>
    %52 = vector.shape_cast %51 : vector<1xf32> to vector<1x1x1x1xf32>
    %53 = vector.extract %52[0, 0, 0, 0] : f32 from vector<1x1x1x1xf32>
    %54 = vector.broadcast %53 : f32 to vector<1x1x1xf32>
    %55 = tpu.iota {dimensions = array<i32: 0>} : vector<4x4xi32>
    %56 = tpu.iota {dimensions = array<i32: 1>} : vector<4x4xi32>
    %57 = arith.cmpi eq, %55, %56 : vector<4x4xi32>
    %58 = arith.extui %57 : vector<4x4xi1> to vector<4x4xi32>
    %59 = arith.sitofp %58 : vector<4x4xi32> to vector<4x4xf32>
    %60 = vector.shape_cast %59 : vector<4x4xf32> to vector<1x4x4xf32>
    %61 = arith.mulf %48, %60 : vector<1x4x4xf32>
    %62 = vector.shape_cast %61 : vector<1x4x4xf32> to vector<1x1x4x4xf32>
    %cst_30 = arith.constant dense<0.000000e+00> : vector<1xf32>
    %63 = vector.multi_reduction <add>, %62, %cst_30 [1, 2, 3] : vector<1x1x4x4xf32> to vector<1xf32>
    %64 = vector.shape_cast %63 : vector<1xf32> to vector<1x1x1x1xf32>
    %65 = vector.extract %64[0, 0, 0, 0] : f32 from vector<1x1x1x1xf32>
    %66 = vector.broadcast %65 : f32 to vector<1x1x1xf32>
    "tpu.trace_start"() <{level = 10 : i32, message = "bnc,bnk->bck"}> : () -> ()
    %cst_31 = arith.constant dense<0.000000e+00> : vector<1x4x4xf32>
    %67 = tpu.matmul %38, %38, %cst_31 {dimension_numbers = #tpu.dot_dimension_numbers<[1], [1], [2], [2], [0, 0, 0, 2, 1, 2], [0], [0]>} : vector<1x8x4xf32>, vector<1x8x4xf32>, vector<1x4x4xf32> -> vector<1x4x4xf32>
    "tpu.trace_stop"() : () -> ()
    %cst_32 = arith.constant 2.000000e+00 : f32
    %68 = vector.broadcast %cst_32 : f32 to vector<1x1x1xf32>
    %69 = arith.mulf %68, %66 : vector<1x1x1xf32>
    %70 = arith.subf %54, %69 : vector<1x1x1xf32>
    %71 = arith.mulf %67, %67 : vector<1x4x4xf32>
    %72 = vector.shape_cast %71 : vector<1x4x4xf32> to vector<1x1x4x4xf32>
    %cst_33 = arith.constant dense<0.000000e+00> : vector<1xf32>
    %73 = vector.multi_reduction <add>, %72, %cst_33 [1, 2, 3] : vector<1x1x4x4xf32> to vector<1xf32>
    %74 = vector.shape_cast %73 : vector<1xf32> to vector<1x1x1x1xf32>
    %75 = vector.extract %74[0, 0, 0, 0] : f32 from vector<1x1x1x1xf32>
    %76 = vector.broadcast %75 : f32 to vector<1x1x1xf32>
    %77 = arith.addf %70, %76 : vector<1x1x1xf32>
    %cst_34 = arith.constant 0.000000e+00 : f32
    %78 = vector.broadcast %cst_34 : f32 to vector<1x8x4xf32>
    %79 = arith.subf %78, %38 : vector<1x8x4xf32>
    %cst_35 = arith.constant 1.000000e-15 : f32
    %80 = vector.broadcast %cst_35 : f32 to vector<1x8x4xf32>
    %81 = arith.addf %38, %80 : vector<1x8x4xf32>
    %82 = math.log %81 : vector<1x8x4xf32>
    %83 = arith.mulf %79, %82 : vector<1x8x4xf32>
    %84 = vector.shape_cast %83 : vector<1x8x4xf32> to vector<1x1x8x4xf32>
    %cst_36 = arith.constant dense<0.000000e+00> : vector<1xf32>
    %85 = vector.multi_reduction <add>, %84, %cst_36 [1, 2, 3] : vector<1x1x8x4xf32> to vector<1xf32>
    %86 = vector.shape_cast %85 : vector<1xf32> to vector<1x1x1x1xf32>
    %87 = vector.extract %86[0, 0, 0, 0] : f32 from vector<1x1x1x1xf32>
    %88 = vector.broadcast %87 : f32 to vector<1x1x1xf32>
    %c0_37 = arith.constant 0 : index
    %c0_38 = arith.constant 0 : index
    %c0_39 = arith.constant 0 : index
    %89 = vector.load %arg8[%c0_37, %c0_38, %c0_39] : memref<1x1x2xf32, #tpu.memory_space<vmem>>, vector<1x1x1xf32>
    tpu.vector_store %arg8[%c0_37, %c0_38, %c0_39], %77 {strides = array<i32>} : memref<1x1x2xf32, #tpu.memory_space<vmem>>, vector<1x1x1xf32>,
    %c0_40 = arith.constant 0 : index
    %c0_41 = arith.constant 0 : index
    %c1 = arith.constant 1 : index
    %90 = vector.load %arg8[%c0_40, %c0_41, %c1] : memref<1x1x2xf32, #tpu.memory_space<vmem>>, vector<1x1x1xf32>
    tpu.vector_store %arg8[%c0_40, %c0_41, %c1], %88 {strides = array<i32>} : memref<1x1x2xf32, #tpu.memory_space<vmem>>, vector<1x1x1xf32>,
    return
  }
  func.func @transform_0(%arg0: i32) -> (i32, i32, i32) {
    %c0_i32 = arith.constant 0 : i32
    %c0_i32_0 = arith.constant 0 : i32
    %c0_i32_1 = arith.constant 0 : i32
    return %arg0, %c0_i32, %c0_i32_0 : i32, i32, i32
  }
  func.func @transform_1(%arg0: i32) -> (i32, i32, i32) {
    %c0_i32 = arith.constant 0 : i32
    %c0_i32_0 = arith.constant 0 : i32
    %c0_i32_1 = arith.constant 0 : i32
    return %arg0, %c0_i32, %c0_i32_0 : i32, i32, i32
  }
  func.func @transform_2(%arg0: i32) -> (i32, i32, i32) {
    %c0_i32 = arith.constant 0 : i32
    %c0_i32_0 = arith.constant 0 : i32
    %c0_i32_1 = arith.constant 0 : i32
    return %arg0, %c0_i32, %c0_i32_0 : i32, i32, i32
  }
  func.func @transform_3(%arg0: i32) -> (i32, i32) {
    %c0_i32 = arith.constant 0 : i32
    %c0_i32_0 = arith.constant 0 : i32
    %c0_i32_1 = arith.constant 0 : i32
    return %c0_i32, %c0_i32_0 : i32, i32
  }
  func.func @transform_4(%arg0: i32) -> (i32, i32) {
    %c0_i32 = arith.constant 0 : i32
    %c0_i32_0 = arith.constant 0 : i32
    %c0_i32_1 = arith.constant 0 : i32
    return %c0_i32, %c0_i32_0 : i32, i32
  }
  func.func @transform_5(%arg0: i32) -> (i32, i32, i32) {
    %c0_i32 = arith.constant 0 : i32
    %c0_i32_0 = arith.constant 0 : i32
    %c0_i32_1 = arith.constant 0 : i32
    return %arg0, %c0_i32, %c0_i32_0 : i32, i32, i32
  }
  func.func @transform_6(%arg0: i32) -> (i32, i32, i32) {
    %c0_i32 = arith.constant 0 : i32
    %c0_i32_0 = arith.constant 0 : i32
    %c0_i32_1 = arith.constant 0 : i32
    return %arg0, %c0_i32, %c0_i32_0 : i32, i32, i32
  }
  func.func @transform_7(%arg0: i32) -> (i32, i32, i32) {
    %c0_i32 = arith.constant 0 : i32
    %c0_i32_0 = arith.constant 0 : i32
    %c0_i32_1 = arith.constant 0 : i32
    return %arg0, %c0_i32, %c0_i32_0 : i32, i32, i32
  }
}

</mosaic_0001>

<llo_original>
// kernel: tpu_custom_call.1
$region0: #{tpu_custom_call.1}
  #allocation0 [shape = 'u32[]', space=smem, size = 0x4, offset = 0x4, fixed_abs, tag = 'smem constant byte address 0x4 - core index']
  #allocation1 [shape = 'u32[144,128]{1,0:T(1,128)}', space=vmem, size = 0x12000, scoped, tag = 'internal scratch']
  %s0 = inlined_call_operand.vmem [shape: f32[2,8,32], index: 0, kind: input, shape index: {}]
  %s1 = inlined_call_operand.vmem [shape: s8[2,8,8], index: 1, kind: input, shape index: {}]
  %s2 = inlined_call_operand.vmem [shape: f32[2,8,1], index: 2, kind: input, shape index: {}]
  %s3 = inlined_call_operand.vmem [shape: f32[64,4], index: 3, kind: input, shape index: {}]
  %s4 = inlined_call_operand.vmem [shape: f32[1,4], index: 4, kind: input, shape index: {}]
  %s5 = inlined_call_operand.hbm [shape: f32[2,4,32], index: 5, kind: output, shape index: {0}]
  %s6 = inlined_call_operand.hbm [shape: f32[2,4,4], index: 6, kind: output, shape index: {1}]
  %s7 = inlined_call_operand.hbm [shape: f32[2,1,2], index: 7, kind: output, shape index: {2}]
  %8 = xla_tuple %s5, %s6, %s7
  %s9 = sld [smem:[#allocation0]]
  $region69: #{tpu_custom_call.1} parent=0
    _
  %s11 = ssub.s32 1, %s9
  %s12 = scalar_select 0, %s11, %s9
  $region1: #{tpu_custom_call.1} parent=0
    #allocation2 [shape = 'u8[4096]{0}', space=vmem, size = 0x1000, scoped, tag = 'output window, operand 0']
    #allocation3 [shape = 's32[2]{0}', space=sflag, size = 0x8, scoped, tag = 'scoped memory for tpu_custom_call.1']
    #allocation4 [shape = 'u8[4096]{0}', space=vmem, size = 0x1000, scoped, tag = 'output window, operand 1']
    #allocation5 [shape = 's32[2]{0}', space=sflag, size = 0x8, scoped, tag = 'scoped memory for tpu_custom_call.1']
    #allocation6 [shape = 'u8[1024]{0}', space=vmem, size = 0x400, scoped, tag = 'output window, operand 2']
    %13 = vsyncpa [#allocation3], 0
    %s14 = scalar_lea.sflag [#allocation3], 1
    %15 = vsyncpa %s14, 0
    %16 = vsyncpa [#allocation5], 0
    %s17 = scalar_lea.sflag [#allocation5], 1
    %18 = vsyncpa %s17, 0
    loop: start=0, step=1, limit=4
    $region2: #{tpu_custom_call.1} parent=1 // loop_pre_header
      _
    $region3: #{tpu_custom_call.1} parent=1 // loop_header
      %s20 = sphi 0, %s24
      %p21 = scmp.ge.s32.totalorder %s20, 4
      %s30 = sphi 0, %s32
      %s33 = sphi 0, %s30
      %s34 = sphi 0, %s33
      %s50 = sphi 0, %s34
      %s56 = sphi 0, %s58
      %s59 = sphi 0, %s56
      %s60 = sphi 0, %s59
      %s76 = sphi 0, %s60
      %s82 = sphi 0, %s84
      %s85 = sphi 0, %s82
      %s86 = sphi 0, %s85
      %s102 = sphi 0, %s86
      %s106 = sphi 0, %s106
      %s108 = sphi 0, %s106
      %s109 = sphi 0, %s108
      %s123 = sphi 0, %s109
      %s127 = sphi 0, %s127
      %s129 = sphi 0, %s127
      %s130 = sphi 0, %s129
      %s144 = sphi 0, %s130
      %s150 = sphi 0, %s152
      %s153 = sphi 0, %s150
      %s154 = sphi 0, %s153
      %s170 = sphi 0, %s154
      %s176 = sphi 0, %s178
      %s179 = sphi 0, %s176
      %s180 = sphi 0, %s179
      %s196 = sphi 0, %s180
      %s202 = sphi 0, %s204
      %s205 = sphi 0, %s202
      %s206 = sphi 0, %s205
      %s222 = sphi 0, %s206
    $region4: #{tpu_custom_call.1} parent=1 // loop_header_branch
      %23 = sbr.rel (%p21) target = $region8
    $region5: #{tpu_custom_call.1} parent=1 // loop_body
      %s25 = ssub.s32 %s20, 1
      %s26 = ssub.s32 %s20, 2
      %s27 = sadd.s32 %s20, 1
      %s28 = ssub.s32 %s20, %s27
      %p29 = scmp.eq.s32.totalorder %s28, 0
      %s31 = sadd.s32 %s30, 1
      %s32 = scalar_select %p29, %s30, %s31
      %p35 = pneg %p29
      %p36 = scmp.eq.s32.totalorder %s20, 1
      %p37 = por %p35, %p36
      %p38 = scmp.ne.s32.totalorder %s30, %s33
      %p39 = scmp.eq.s32.totalorder %s20, 0
      %p40 = por %p38, %p39
      %p41 = scmp.ne.s32.totalorder %s30, %s33
      %p42 = scmp.eq.s32.totalorder %s25, 1
      %p43 = por %p41, %p42
      %p44 = scmp.ne.s32.totalorder %s33, %s34
      %p45 = scmp.eq.s32.totalorder %s25, 0
      %p46 = por %p44, %p45
      %p47 = scmp.ne.s32.totalorder %s33, %s34
      %p48 = scmp.eq.s32.totalorder %s26, 1
      %p49 = por %p47, %p48
      %p51 = scmp.ne.s32.totalorder %s34, %s50
      %p52 = scmp.eq.s32.totalorder %s26, 0
      %p53 = por %p51, %p52
      %s54 = ssub.s32 %s20, %s27
      %p55 = scmp.eq.s32.totalorder %s54, 0
      %s57 = sadd.s32 %s56, 1
      %s58 = scalar_select %p55, %s56, %s57
      %p61 = pneg %p55
      %p62 = scmp.eq.s32.totalorder %s20, 1
      %p63 = por %p61, %p62
      %p64 = scmp.ne.s32.totalorder %s56, %s59
      %p65 = scmp.eq.s32.totalorder %s20, 0
      %p66 = por %p64, %p65
      %p67 = scmp.ne.s32.totalorder %s56, %s59
      %p68 = scmp.eq.s32.totalorder %s25, 1
      %p69 = por %p67, %p68
      %p70 = scmp.ne.s32.totalorder %s59, %s60
      %p71 = scmp.eq.s32.totalorder %s25, 0
      %p72 = por %p70, %p71
      %p73 = scmp.ne.s32.totalorder %s59, %s60
      %p74 = scmp.eq.s32.totalorder %s26, 1
      %p75 = por %p73, %p74
      %p77 = scmp.ne.s32.totalorder %s60, %s76
      %p78 = scmp.eq.s32.totalorder %s26, 0
      %p79 = por %p77, %p78
      %s80 = ssub.s32 %s20, %s27
      %p81 = scmp.eq.s32.totalorder %s80, 0
      %s83 = sadd.s32 %s82, 1
      %s84 = scalar_select %p81, %s82, %s83
      %p87 = pneg %p81
      %p88 = scmp.eq.s32.totalorder %s20, 1
      %p89 = por %p87, %p88
      %p90 = scmp.ne.s32.totalorder %s82, %s85
      %p91 = scmp.eq.s32.totalorder %s20, 0
      %p92 = por %p90, %p91
      %p93 = scmp.ne.s32.totalorder %s82, %s85
      %p94 = scmp.eq.s32.totalorder %s25, 1
      %p95 = por %p93, %p94
      %p96 = scmp.ne.s32.totalorder %s85, %s86
      %p97 = scmp.eq.s32.totalorder %s25, 0
      %p98 = por %p96, %p97
      %p99 = scmp.ne.s32.totalorder %s85, %s86
      %p100 = scmp.eq.s32.totalorder %s26, 1
      %p101 = por %p99, %p100
      %p103 = scmp.ne.s32.totalorder %s86, %s102
      %p104 = scmp.eq.s32.totalorder %s26, 0
      %p105 = por %p103, %p104
      %s107 = sadd.s32 %s106, 1
      %p110 = scmp.eq.s32.totalorder %s20, 1
      %p111 = scmp.ne.s32.totalorder %s106, %s108
      %p112 = scmp.eq.s32.totalorder %s20, 0
      %p113 = por %p111, %p112
      %p114 = scmp.ne.s32.totalorder %s106, %s108
      %p115 = scmp.eq.s32.totalorder %s25, 1
      %p116 = por %p114, %p115
      %p117 = scmp.ne.s32.totalorder %s108, %s109
      %p118 = scmp.eq.s32.totalorder %s25, 0
      %p119 = por %p117, %p118
      %p120 = scmp.ne.s32.totalorder %s108, %s109
      %p121 = scmp.eq.s32.totalorder %s26, 1
      %p122 = por %p120, %p121
      %p124 = scmp.ne.s32.totalorder %s109, %s123
      %p125 = scmp.eq.s32.totalorder %s26, 0
      %p126 = por %p124, %p125
      %s128 = sadd.s32 %s127, 1
      %p131 = scmp.eq.s32.totalorder %s20, 1
      %p132 = scmp.ne.s32.totalorder %s127, %s129
      %p133 = scmp.eq.s32.totalorder %s20, 0
      %p134 = por %p132, %p133
      %p135 = scmp.ne.s32.totalorder %s127, %s129
      %p136 = scmp.eq.s32.totalorder %s25, 1
      %p137 = por %p135, %p136
      %p138 = scmp.ne.s32.totalorder %s129, %s130
      %p139 = scmp.eq.s32.totalorder %s25, 0
      %p140 = por %p138, %p139
      %p141 = scmp.ne.s32.totalorder %s129, %s130
      %p142 = scmp.eq.s32.totalorder %s26, 1
      %p143 = por %p141, %p142
      %p145 = scmp.ne.s32.totalorder %s130, %s144
      %p146 = scmp.eq.s32.totalorder %s26, 0
      %p147 = por %p145, %p146
      %s148 = ssub.s32 %s20, %s27
      %p149 = scmp.eq.s32.totalorder %s148, 0
      %s151 = sadd.s32 %s150, 1
      %s152 = scalar_select %p149, %s150, %s151
      %p155 = pneg %p149
      %p156 = scmp.eq.s32.totalorder %s20, 1
      %p157 = por %p155, %p156
      %p158 = scmp.ne.s32.totalorder %s150, %s153
      %p159 = scmp.eq.s32.totalorder %s20, 0
      %p160 = por %p158, %p159
      %p161 = scmp.ne.s32.totalorder %s150, %s153
      %p162 = scmp.eq.s32.totalorder %s25, 1
      %p163 = por %p161, %p162
      %p164 = scmp.ne.s32.totalorder %s153, %s154
      %p165 = scmp.eq.s32.totalorder %s25, 0
      %p166 = por %p164, %p165
      %p167 = scmp.ne.s32.totalorder %s153, %s154
      %p168 = scmp.eq.s32.totalorder %s26, 1
      %p169 = por %p167, %p168
      %p171 = scmp.ne.s32.totalorder %s154, %s170
      %p172 = scmp.eq.s32.totalorder %s26, 0
      %p173 = por %p171, %p172
      %s174 = ssub.s32 %s20, %s27
      %p175 = scmp.eq.s32.totalorder %s174, 0
      %s177 = sadd.s32 %s176, 1
      %s178 = scalar_select %p175, %s176, %s177
      %p181 = pneg %p175
      %p182 = scmp.eq.s32.totalorder %s20, 1
      %p183 = por %p181, %p182
      %p184 = scmp.ne.s32.totalorder %s176, %s179
      %p185 = scmp.eq.s32.totalorder %s20, 0
      %p186 = por %p184, %p185
      %p187 = scmp.ne.s32.totalorder %s176, %s179
      %p188 = scmp.eq.s32.totalorder %s25, 1
      %p189 = por %p187, %p188
      %p190 = scmp.ne.s32.totalorder %s179, %s180
      %p191 = scmp.eq.s32.totalorder %s25, 0
      %p192 = por %p190, %p191
      %p193 = scmp.ne.s32.totalorder %s179, %s180
      %p194 = scmp.eq.s32.totalorder %s26, 1
      %p195 = por %p193, %p194
      %p197 = scmp.ne.s32.totalorder %s180, %s196
      %p198 = scmp.eq.s32.totalorder %s26, 0
      %p199 = por %p197, %p198
      %s200 = ssub.s32 %s20, %s27
      %p201 = scmp.eq.s32.totalorder %s200, 0
      %s203 = sadd.s32 %s202, 1
      %s204 = scalar_select %p201, %s202, %s203
      %p207 = pneg %p201
      %p208 = scmp.eq.s32.totalorder %s20, 1
      %p209 = por %p207, %p208
      %p210 = scmp.ne.s32.totalorder %s202, %s205
      %p211 = scmp.eq.s32.totalorder %s20, 0
      %p212 = por %p210, %p211
      %p213 = scmp.ne.s32.totalorder %s202, %s205
      %p214 = scmp.eq.s32.totalorder %s25, 1
      %p215 = por %p213, %p214
      %p216 = scmp.ne.s32.totalorder %s205, %s206
      %p217 = scmp.eq.s32.totalorder %s25, 0
      %p218 = por %p216, %p217
      %p219 = scmp.ne.s32.totalorder %s205, %s206
      %p220 = scmp.eq.s32.totalorder %s26, 1
      %p221 = por %p219, %p220
      %p223 = scmp.ne.s32.totalorder %s206, %s222
      %p224 = scmp.eq.s32.totalorder %s26, 0
      %p225 = por %p223, %p224
      %p226 = scmp.le.s32.totalorder 1, %s20
      %p227 = scmp.lt.s32.totalorder %s20, 3
      %p228 = pnand %p226, %p227
      %p229 = pneg %p228
      // Predicated region
      $region9: #{tpu_custom_call.1} parent=5 // pred_check
        _
      $region10: #{tpu_custom_call.1} parent=5 // pred_check_branch
        %231 = sbr.rel (%p228) target = $region12
      $region11: #{tpu_custom_call.1} parent=5 // pred_region
        %s232 = ssub.s32 %s20, 1
        // Predicated region
        $region13: #{tpu_custom_call.1} parent=11 // pred_check
          %p233 = pneg %p119
        $region14: #{tpu_custom_call.1} parent=11 // pred_check_branch
          %235 = sbr.rel (%p233) target = $region16
        $region15: #{tpu_custom_call.1} parent=11 // pred_region
          _
        $region16: #{tpu_custom_call.1} parent=11 // pred_fallthru
          _
        // Predicated region
        $region17: #{tpu_custom_call.1} parent=11 // pred_check
          %p236 = pneg %p140
        $region18: #{tpu_custom_call.1} parent=11 // pred_check_branch
          %238 = sbr.rel (%p236) target = $region20
        $region19: #{tpu_custom_call.1} parent=11 // pred_region
          _
        $region20: #{tpu_custom_call.1} parent=11 // pred_fallthru
          _
      $region12: #{tpu_custom_call.1} parent=5 // pred_fallthru
        _
      %p239 = scmp.lt.s32.totalorder %s20, 2
      // Predicated region
      $region21: #{tpu_custom_call.1} parent=5 // pred_check
        %p240 = pneg %p239
      $region22: #{tpu_custom_call.1} parent=5 // pred_check_branch
        %242 = sbr.rel (%p240) target = $region24
      $region23: #{tpu_custom_call.1} parent=5 // pred_region
        // Predicated region
        $region25: #{tpu_custom_call.1} parent=23 // pred_check
          %p243 = pneg %p40
        $region26: #{tpu_custom_call.1} parent=23 // pred_check_branch
          %245 = sbr.rel (%p243) target = $region28
        $region27: #{tpu_custom_call.1} parent=23 // pred_region
          %p246 = scmp.lt.s32.totalorder %s20, 1
          %s247 = scalar_select %p246, %s20, 1
          %s248 = smul.addr %s247, 8
          %s249 = scalar_lea.vmem %s0, %s248
        $region28: #{tpu_custom_call.1} parent=23 // pred_fallthru
          _
        // Predicated region
        $region29: #{tpu_custom_call.1} parent=23 // pred_check
          %p250 = pneg %p66
        $region30: #{tpu_custom_call.1} parent=23 // pred_check_branch
          %252 = sbr.rel (%p250) target = $region32
        $region31: #{tpu_custom_call.1} parent=23 // pred_region
          %p253 = scmp.lt.s32.totalorder %s20, 1
          %s254 = scalar_select %p253, %s20, 1
          %s255 = smul.addr %s254, 2
          %s256 = scalar_lea.vmem %s1, %s255
        $region32: #{tpu_custom_call.1} parent=23 // pred_fallthru
          _
        // Predicated region
        $region33: #{tpu_custom_call.1} parent=23 // pred_check
          %p257 = pneg %p92
        $region34: #{tpu_custom_call.1} parent=23 // pred_check_branch
          %259 = sbr.rel (%p257) target = $region36
        $region35: #{tpu_custom_call.1} parent=23 // pred_region
          %p260 = scmp.lt.s32.totalorder %s20, 1
          %s261 = scalar_select %p260, %s20, 1
          %s262 = smul.addr %s261, 8
          %s263 = scalar_lea.vmem %s2, %s262
        $region36: #{tpu_custom_call.1} parent=23 // pred_fallthru
          _
      $region24: #{tpu_custom_call.1} parent=5 // pred_fallthru
        _
      %p264 = scmp.le.s32.totalorder 1, %s20
      %p265 = scmp.lt.s32.totalorder %s20, 3
      %p266 = pnand %p264, %p265
      %p267 = pneg %p266
      // Predicated region
      $region37: #{tpu_custom_call.1} parent=5 // pred_check
        _
      $region38: #{tpu_custom_call.1} parent=5 // pred_check_branch
        %269 = sbr.rel (%p266) target = $region40
      $region39: #{tpu_custom_call.1} parent=5 // pred_region
        %s270 = ssub.s32 %s20, 1
        %p271 = scmp.lt.s32.totalorder %s25, 1
        %s272 = scalar_select %p271, %s25, 1
        %s273 = smul.addr %s272, 8
        %s274 = scalar_lea.vmem %s0, %s273
        %p275 = pneg %p46
        %p276 = pneg %p43
        %p277 = scmp.lt.s32.totalorder %s25, 1
        %s278 = scalar_select %p277, %s25, 1
        %s279 = smul.addr %s278, 2
        %s280 = scalar_lea.vmem %s1, %s279
        %p281 = pneg %p72
        %p282 = pneg %p69
        %p283 = scmp.lt.s32.totalorder %s25, 1
        %s284 = scalar_select %p283, %s25, 1
        %s285 = smul.addr %s284, 8
        %s286 = scalar_lea.vmem %s2, %s285
        %p287 = pneg %p98
        %p288 = pneg %p95
        %p289 = pneg %p119
        %p290 = pneg %p116
        %p291 = pneg %p140
        %p292 = pneg %p137
        %p293 = pneg %p166
        %p294 = pneg %p163
        %s295 = sand.u32 %s153, 1
        %s296 = scalar_lea.sflag [#allocation3], %s295
        %s297 = sand.u32 %s153, 1
        %s298 = smul.addr %s297, 4
        %s299 = scalar_lea.vmem [#allocation2], %s298
        %p300 = pneg %p192
        %p301 = pneg %p189
        %s302 = sand.u32 %s25, 1
        %s303 = scalar_lea.sflag [#allocation5], %s302
        %s304 = sand.u32 %s179, 1
        %s305 = smul.addr %s304, 4
        %s306 = scalar_lea.vmem [#allocation4], %s305
        %p307 = pneg %p218
        %p308 = pneg %p215
        %s309 = sand.u32 %s25, 1
        %s310 = scalar_lea.sflag [#allocation5], %s309
        %s311 = sand.u32 %s205, 1
        %s312 = scalar_lea.vmem [#allocation6], %s311
        %p313 = scmp.lt.s32.totalorder %s25, 1
        %s314 = scalar_select %p313, %s25, 1
        %s315 = smul.addr %s314, 8
        %s316 = scalar_lea.vmem %s0, %s315
        %p317 = scmp.lt.s32.totalorder %s25, 1
        %s318 = scalar_select %p317, %s25, 1
        %s319 = smul.addr %s318, 2
        %s320 = scalar_lea.vmem %s1, %s319
        %p321 = scmp.lt.s32.totalorder %s25, 1
        %s322 = scalar_select %p321, %s25, 1
        %s323 = smul.addr %s322, 8
        %s324 = scalar_lea.vmem %s2, %s323
        %v327 = vld [vmem:[%s316] sm:$0xff]
        %v328 = vld [vmem:[%s320] sm:$0x3]
        %v329 = vunpack.c.l.s8.bf16 %v328
        %v330 = vld [vmem:[%s324] sm:$0xff]
        %v331 = vld [vmem:[%s3] sm:$0xff]
        %v332 = vld [vmem:[%s3 + $0x8] sm:$0xff]
        %v333 = vld [vmem:[%s3 + $0x10] sm:$0xff]
        %v334 = vld [vmem:[%s3 + $0x18] sm:$0xff]
        %v335 = vld [vmem:[%s3 + $0x20] sm:$0xff]
        %v336 = vld [vmem:[%s3 + $0x28] sm:$0xff]
        %v337 = vld [vmem:[%s3 + $0x30] sm:$0xff]
        %v338 = vld [vmem:[%s3 + $0x38] sm:$0xff]
        %v339 = vld [vmem:[%s4] sm:$0x1]
        %vm340 = vcmask 64512
        %v342 = vsel %vm340, %v329, 0
        %vm344 = vcmask 1043456
        %v346 = vsel %vm344, 1065369472, 0
        %348 = vmatprep.subr.bf16.mxu0 0
        %349 = vmatpush1.bf16.msra.mxu0 0
        %350 = vmatprep.subr.bf16.mxu0 0
        %351 = vmatpush1.bf16.msra.mxu0 0
        %352 = vmatprep.subr.bf16.mxu0 0
        %353 = vmatpush1.bf16.msra.mxu0 0
        %354 = vmatprep.subr.bf16.mxu0 0
        %355 = vmatpush1.bf16.msra.mxu0 0
        %356 = vmatprep.subr.bf16.mxu0 0
        %357 = vmatpush1.bf16.msra.mxu0 0
        %358 = vmatprep.subr.bf16.mxu0 0
        %359 = vmatpush1.bf16.msra.mxu0 0
        %360 = vmatprep.subr.bf16.mxu0 0
        %361 = vmatpush1.bf16.msra.mxu0 0
        %362 = vmatprep.subr.bf16.mxu0 0
        %363 = vmatpush1.bf16.msra.mxu0 %v346
        %364 = vmatprep.subr.bf16.mxu0 0
        %365 = vmatpush2.bf16.msra.mxu0 0
        %366 = vmatprep.subr.bf16.mxu0 0
        %367 = vmatpush2.bf16.msra.mxu0 0
        %368 = vmatprep.subr.bf16.mxu0 0
        %369 = vmatpush2.bf16.msra.mxu0 0
        %370 = vmatprep.subr.bf16.mxu0 0
        %371 = vmatpush2.bf16.msra.mxu0 0
        %372 = vmatprep.subr.bf16.mxu0 0
        %373 = vmatpush2.bf16.msra.mxu0 0
        %374 = vmatprep.subr.bf16.mxu0 0
        %375 = vmatpush2.bf16.msra.mxu0 0
        %376 = vmatprep.subr.bf16.mxu0 0
        %377 = vmatpush2.bf16.msra.mxu0 0
        %378 = vmatprep.subr.bf16.mxu0 0
        %379 = vmatpush2.bf16.msra.mxu0 0
        %380 = vmatprep.mubr.bf16.mxu0 0
        %381 = vmatmul.mubr.bf16.gmra.mxu0 %v342
        %v382 = vpop.f32.mrf.mxu0
        %v383 = vadd.f32 0.0, %v382
        %v384 = vpop.f32.mrf.mxu0
        %v385 = vpop.f32.mrf.mxu0
        %v386 = vpop.f32.mrf.mxu0
        %387 = vdwg.mxu0
        %v388 = vmax.f32 %v383, 1.0
        %v389 = vrcp.pop %v388
        %v390 = vpack.c.bf16 %v327, %v327
        %v391 = vunpack.c.l.bf16 %v390
        %v392 = vsub.f32 %v327, %v391
        %v393 = vpack.c.bf16 %v392, %v392
        %v395 = vsel %vm344, %v393, 0
        %397 = vmatprep.subr.bf16.mxu0 0
        %398 = vmatpush1.bf16.msra.mxu0 0
        %399 = vmatprep.subr.bf16.mxu0 0
        %400 = vmatpush1.bf16.msra.mxu0 0
        %401 = vmatprep.subr.bf16.mxu0 0
        %402 = vmatpush1.bf16.msra.mxu0 0
        %403 = vmatprep.subr.bf16.mxu0 0
        %404 = vmatpush1.bf16.msra.mxu0 0
        %405 = vmatprep.subr.bf16.mxu0 0
        %406 = vmatpush1.bf16.msra.mxu0 0
        %407 = vmatprep.subr.bf16.mxu0 0
        %408 = vmatpush1.bf16.msra.mxu0 0
        %409 = vmatprep.subr.bf16.mxu0 0
        %410 = vmatpush1.bf16.msra.mxu0 0
        %411 = vmatprep.subr.bf16.mxu0 0
        %412 = vmatpush1.bf16.msra.mxu0 %v395
        %413 = vmatprep.subr.bf16.mxu0 0
        %414 = vmatpush2.bf16.msra.mxu0 0
        %415 = vmatprep.subr.bf16.mxu0 0
        %416 = vmatpush2.bf16.msra.mxu0 0
        %417 = vmatprep.subr.bf16.mxu0 0
        %418 = vmatpush2.bf16.msra.mxu0 0
        %419 = vmatprep.subr.bf16.mxu0 0
        %420 = vmatpush2.bf16.msra.mxu0 0
        %421 = vmatprep.subr.bf16.mxu0 0
        %422 = vmatpush2.bf16.msra.mxu0 0
        %423 = vmatprep.subr.bf16.mxu0 0
        %424 = vmatpush2.bf16.msra.mxu0 0
        %425 = vmatprep.subr.bf16.mxu0 0
        %426 = vmatpush2.bf16.msra.mxu0 0
        %427 = vmatprep.subr.bf16.mxu0 0
        %428 = vmatpush2.bf16.msra.mxu0 0
        %429 = vmatprep.mubr.bf16.mxu0 0
        %430 = vmatmul.mubr.bf16.gmra.mxu0 %v342
        %v431 = vpop.f32.mrf.mxu0
        %v432 = vadd.f32 0.0, %v431
        %v433 = vpop.f32.mrf.mxu0
        %v434 = vpop.f32.mrf.mxu0
        %v435 = vpop.f32.mrf.mxu0
        %436 = vdwg.mxu0
        %v438 = vsel %vm344, %v390, 0
        %440 = vmatprep.subr.bf16.mxu0 0
        %441 = vmatpush1.bf16.msra.mxu0 0
        %442 = vmatprep.subr.bf16.mxu0 0
        %443 = vmatpush1.bf16.msra.mxu0 0
        %444 = vmatprep.subr.bf16.mxu0 0
        %445 = vmatpush1.bf16.msra.mxu0 0
        %446 = vmatprep.subr.bf16.mxu0 0
        %447 = vmatpush1.bf16.msra.mxu0 0
        %448 = vmatprep.subr.bf16.mxu0 0
        %449 = vmatpush1.bf16.msra.mxu0 0
        %450 = vmatprep.subr.bf16.mxu0 0
        %451 = vmatpush1.bf16.msra.mxu0 0
        %452 = vmatprep.subr.bf16.mxu0 0
        %453 = vmatpush1.bf16.msra.mxu0 0
        %454 = vmatprep.subr.bf16.mxu0 0
        %455 = vmatpush1.bf16.msra.mxu0 %v438
        %456 = vmatprep.subr.bf16.mxu0 0
        %457 = vmatpush2.bf16.msra.mxu0 0
        %458 = vmatprep.subr.bf16.mxu0 0
        %459 = vmatpush2.bf16.msra.mxu0 0
        %460 = vmatprep.subr.bf16.mxu0 0
        %461 = vmatpush2.bf16.msra.mxu0 0
        %462 = vmatprep.subr.bf16.mxu0 0
        %463 = vmatpush2.bf16.msra.mxu0 0
        %464 = vmatprep.subr.bf16.mxu0 0
        %465 = vmatpush2.bf16.msra.mxu0 0
        %466 = vmatprep.subr.bf16.mxu0 0
        %467 = vmatpush2.bf16.msra.mxu0 0
        %468 = vmatprep.subr.bf16.mxu0 0
        %469 = vmatpush2.bf16.msra.mxu0 0
        %470 = vmatprep.subr.bf16.mxu0 0
        %471 = vmatpush2.bf16.msra.mxu0 0
        %472 = vmatprep.mubr.bf16.mxu0 0
        %473 = vmatmul.mubr.bf16.gmra.mxu0 %v342
        %v474 = vpop.f32.mrf.mxu0
        %v475 = vadd.f32 %v432, %v474
        %v476 = vpop.f32.mrf.mxu0
        %v477 = vpop.f32.mrf.mxu0
        %v478 = vpop.f32.mrf.mxu0
        %479 = vdwg.mxu0
        %481 = vset.pattern.permute.xlu0 0
        %482 = vperm.xlu0 %481, %v389
        %v483 = vpop.permute.xlu0 %482
        %v485 = vmul.f32 %v475, %v483
        %487 = vrot.lane.b32.xlu0 %v327, 32
        %v488 = vpop.permute.xlu0 %487
        %vm490 = vcmask 261120
        %v491 = vsel %vm490, %v485, %v488
        %v493 = vlaneseq
        %v494 = vshrl.u32 %v493, 7
        %v495 = vsub.s32 0, %v494
        %v496 = vrot.slane %v339, %v495
        %vm498 = vcmask 523264
        %v500 = vsel %vm498, %v491, 0
        %502 = vmatprep.subr.mxu0 0.0
        %503 = vmatpush1.msra.mxu0 0.0
        %504 = vmatprep.subr.mxu0 0.0
        %505 = vmatpush1.msra.mxu0 0.0
        %506 = vmatprep.subr.mxu0 0.0
        %507 = vmatpush1.msra.mxu0 0.0
        %508 = vmatprep.subr.mxu0 0.0
        %509 = vmatpush1.msra.mxu0 0.0
        %510 = vmatprep.subr.mxu0 0.0
        %511 = vmatpush1.msra.mxu0 0.0
        %512 = vmatprep.subr.mxu0 0.0
        %513 = vmatpush1.msra.mxu0 0.0
        %514 = vmatprep.subr.mxu0 0.0
        %515 = vmatpush1.msra.mxu0 0.0
        %516 = vmatprep.subr.mxu0 0.0
        %517 = vmatpush1.msra.mxu0 0.0
        %518 = vmatprep.subr.mxu0 0.0
        %519 = vmatpush1.msra.mxu0 %v338
        %520 = vmatprep.subr.mxu0 0.0
        %521 = vmatpush1.msra.mxu0 %v337
        %522 = vmatprep.subr.mxu0 0.0
        %523 = vmatpush1.msra.mxu0 %v336
        %524 = vmatprep.subr.mxu0 0.0
        %525 = vmatpush1.msra.mxu0 %v335
        %526 = vmatprep.subr.mxu0 0.0
        %527 = vmatpush1.msra.mxu0 %v334
        %528 = vmatprep.subr.mxu0 0.0
        %529 = vmatpush1.msra.mxu0 %v333
        %530 = vmatprep.subr.mxu0 0.0
        %531 = vmatpush1.msra.mxu0 %v332
        %532 = vmatprep.subr.mxu0 0.0
        %533 = vmatpush1.msra.mxu0 %v331
        %534 = vmatprep.subr.mxu0 0.0
        %535 = vmatpush2.msra.mxu0 0.0
        %536 = vmatprep.subr.mxu0 0.0
        %537 = vmatpush2.msra.mxu0 0.0
        %538 = vmatprep.subr.mxu0 0.0
        %539 = vmatpush2.msra.mxu0 0.0
        %540 = vmatprep.subr.mxu0 0.0
        %541 = vmatpush2.msra.mxu0 0.0
        %542 = vmatprep.subr.mxu0 0.0
        %543 = vmatpush2.msra.mxu0 0.0
        %544 = vmatprep.subr.mxu0 0.0
        %545 = vmatpush2.msra.mxu0 0.0
        %546 = vmatprep.subr.mxu0 0.0
        %547 = vmatpush2.msra.mxu0 0.0
        %548 = vmatprep.subr.mxu0 0.0
        %549 = vmatpush2.msra.mxu0 0.0
        %550 = vmatprep.subr.mxu0 0.0
        %551 = vmatpush2.msra.mxu0 0.0
        %552 = vmatprep.subr.mxu0 0.0
        %553 = vmatpush2.msra.mxu0 0.0
        %554 = vmatprep.subr.mxu0 0.0
        %555 = vmatpush2.msra.mxu0 0.0
        %556 = vmatprep.subr.mxu0 0.0
        %557 = vmatpush2.msra.mxu0 0.0
        %558 = vmatprep.subr.mxu0 0.0
        %559 = vmatpush2.msra.mxu0 0.0
        %560 = vmatprep.subr.mxu0 0.0
        %561 = vmatpush2.msra.mxu0 0.0
        %562 = vmatprep.subr.mxu0 0.0
        %563 = vmatpush2.msra.mxu0 0.0
        %564 = vmatprep.subr.mxu0 0.0
        %565 = vmatpush2.msra.mxu0 0.0
        %566 = vmatprep.mubr.f32.mxu0 0.0
        %567 = vmatmul.mubr.f32.gmra.mxu0 %v500
        %v568 = vpop.f32.mrf.mxu0
        %v569 = vadd.f32 %v496, %v568
        %v570 = vpop.f32.mrf.mxu0
        %571 = vdwg.mxu0
        %vm572 = vcmask 31744
        %v573 = vsel %vm572, %v569, -inf
        %574 = vmax.xlane.f32.xlu0 %v573
        %v575 = vpop.xlane.xlu0 %574
        %v576 = vsub.f32 %v569, %v575
        %v577 = vmul.f32 %v576, 1.442695
        %v578 = vpow.pop %v577
        %v579 = vsel %vm572, %v578, 0.0
        %580 = vadd.xlane.f32.xlu0 %v579
        %v581 = vpop.xlane.xlu0 %580
        %v582 = vrcp.pop %v581
        %v583 = vmul.f32 %v578, %v582
        %585 = vset.pattern.permute.xlu0 0
        %586 = vperm.xlu0 %585, %v330
        %v587 = vpop.permute.xlu0 %586
        %v589 = vmul.f32 %v583, %v587
        %590 = vxpose.xlu0.b32.start [1/16] %v589, 128
        %591 = vxpose.xlu0.b32.cont [2/16] 0.0, 128
        %592 = vxpose.xlu0.b32.cont [3/16] 0.0, 128
        %593 = vxpose.xlu0.b32.cont [4/16] 0.0, 128
        %594 = vxpose.xlu0.b32.cont [5/16] 0.0, 128
        %595 = vxpose.xlu0.b32.cont [6/16] 0.0, 128
        %596 = vxpose.xlu0.b32.cont [7/16] 0.0, 128
        %597 = vxpose.xlu0.b32.cont [8/16] 0.0, 128
        %598 = vxpose.xlu0.b32.cont [9/16] 0.0, 128
        %599 = vxpose.xlu0.b32.cont [10/16] 0.0, 128
        %600 = vxpose.xlu0.b32.cont [11/16] 0.0, 128
        %601 = vxpose.xlu0.b32.cont [12/16] 0.0, 128
        %602 = vxpose.xlu0.b32.cont [13/16] 0.0, 128
        %603 = vxpose.xlu0.b32.cont [14/16] 0.0, 128
        %604 = vxpose.xlu0.b32.cont [15/16] 0.0, 128
        %605 = vxpose.xlu0.b32.end [16/16] 0.0, 128
        %v606 = vpop.trf.xlu0
        %v607 = vpop.trf.xlu0
        %v608 = vpop.trf.xlu0
        %v609 = vpop.trf.xlu0
        %v610 = vpop.trf.xlu0
        %v611 = vpop.trf.xlu0
        %v612 = vpop.trf.xlu0
        %v613 = vpop.trf.xlu0
        %v614 = vpop.trf.xlu0
        %v615 = vpop.trf.xlu0
        %v616 = vpop.trf.xlu0
        %v617 = vpop.trf.xlu0
        %v618 = vpop.trf.xlu0
        %v619 = vpop.trf.xlu0
        %v620 = vpop.trf.xlu0
        %v621 = vpop.trf.xlu0
        %v623 = vsel %vm340, %v606, 0
        %625 = vmatprep.subr.mxu0 0.0
        %626 = vmatpush1.msra.mxu0 0.0
        %627 = vmatprep.subr.mxu0 0.0
        %628 = vmatpush1.msra.mxu0 0.0
        %629 = vmatprep.subr.mxu0 0.0
        %630 = vmatpush1.msra.mxu0 0.0
        %631 = vmatprep.subr.mxu0 0.0
        %632 = vmatpush1.msra.mxu0 0.0
        %633 = vmatprep.subr.mxu0 0.0
        %634 = vmatpush1.msra.mxu0 0.0
        %635 = vmatprep.subr.mxu0 0.0
        %636 = vmatpush1.msra.mxu0 0.0
        %637 = vmatprep.subr.mxu0 0.0
        %638 = vmatpush1.msra.mxu0 0.0
        %639 = vmatprep.subr.mxu0 0.0
        %640 = vmatpush1.msra.mxu0 0.0
        %641 = vmatprep.subr.mxu0 0.0
        %642 = vmatpush1.msra.mxu0 0.0
        %643 = vmatprep.subr.mxu0 0.0
        %644 = vmatpush1.msra.mxu0 0.0
        %645 = vmatprep.subr.mxu0 0.0
        %646 = vmatpush1.msra.mxu0 0.0
        %647 = vmatprep.subr.mxu0 0.0
        %648 = vmatpush1.msra.mxu0 0.0
        %649 = vmatprep.subr.mxu0 0.0
        %650 = vmatpush1.msra.mxu0 0.0
        %651 = vmatprep.subr.mxu0 0.0
        %652 = vmatpush1.msra.mxu0 0.0
        %653 = vmatprep.subr.mxu0 0.0
        %654 = vmatpush1.msra.mxu0 0.0
        %655 = vmatprep.subr.mxu0 0.0
        %656 = vmatpush1.msra.mxu0 %v327
        %657 = vmatprep.subr.mxu0 0.0
        %658 = vmatpush2.msra.mxu0 0.0
        %659 = vmatprep.subr.mxu0 0.0
        %660 = vmatpush2.msra.mxu0 0.0
        %661 = vmatprep.subr.mxu0 0.0
        %662 = vmatpush2.msra.mxu0 0.0
        %663 = vmatprep.subr.mxu0 0.0
        %664 = vmatpush2.msra.mxu0 0.0
        %665 = vmatprep.subr.mxu0 0.0
        %666 = vmatpush2.msra.mxu0 0.0
        %667 = vmatprep.subr.mxu0 0.0
        %668 = vmatpush2.msra.mxu0 0.0
        %669 = vmatprep.subr.mxu0 0.0
        %670 = vmatpush2.msra.mxu0 0.0
        %671 = vmatprep.subr.mxu0 0.0
        %672 = vmatpush2.msra.mxu0 0.0
        %673 = vmatprep.subr.mxu0 0.0
        %674 = vmatpush2.msra.mxu0 0.0
        %675 = vmatprep.subr.mxu0 0.0
        %676 = vmatpush2.msra.mxu0 0.0
        %677 = vmatprep.subr.mxu0 0.0
        %678 = vmatpush2.msra.mxu0 0.0
        %679 = vmatprep.subr.mxu0 0.0
        %680 = vmatpush2.msra.mxu0 0.0
        %681 = vmatprep.subr.mxu0 0.0
        %682 = vmatpush2.msra.mxu0 0.0
        %683 = vmatprep.subr.mxu0 0.0
        %684 = vmatpush2.msra.mxu0 0.0
        %685 = vmatprep.subr.mxu0 0.0
        %686 = vmatpush2.msra.mxu0 0.0
        %687 = vmatprep.subr.mxu0 0.0
        %688 = vmatpush2.msra.mxu0 0.0
        %689 = vmatprep.mubr.f32.mxu0 0.0
        %690 = vmatmul.mubr.f32.gmra.mxu0 %v623
        %v691 = vpop.f32.mrf.mxu0
        %v692 = vadd.f32 0.0, %v691
        %v693 = vpop.f32.mrf.mxu0
        %694 = vdwg.mxu0
        %vm695 = vcmask 257024
        %696 = vst.msk [vmem:[%s299] sm:$0xf] %vm695, %v692
        %v697 = vpack.c.bf16 %v589, %v589
        %v698 = vunpack.c.l.bf16 %v697
        %v699 = vsub.f32 %v589, %v698
        %v700 = vpack.c.bf16 %v699, %v699
        %701 = vxpose.xlu0.c.b16.start [1/8] %v700, 128
        %702 = vxpose.xlu0.c.b16.cont [2/8] 0, 128
        %703 = vxpose.xlu0.c.b16.cont [3/8] 0, 128
        %704 = vxpose.xlu0.c.b16.cont [4/8] 0, 128
        %705 = vxpose.xlu0.c.b16.cont [5/8] 0, 128
        %706 = vxpose.xlu0.c.b16.cont [6/8] 0, 128
        %707 = vxpose.xlu0.c.b16.cont [7/8] 0, 128
        %708 = vxpose.xlu0.c.b16.end [8/8] 0, 128
        %v709 = vpop.trf.xlu0
        %v710 = vpop.trf.xlu0
        %v711 = vpop.trf.xlu0
        %v712 = vpop.trf.xlu0
        %v713 = vpop.trf.xlu0
        %v714 = vpop.trf.xlu0
        %v715 = vpop.trf.xlu0
        %v716 = vpop.trf.xlu0
        %v718 = vsel %vm340, %v709, 0
        %v720 = vsel %vm344, %v329, 0
        %722 = vmatprep.subr.bf16.mxu0 0
        %723 = vmatpush1.bf16.msra.mxu0 0
        %724 = vmatprep.subr.bf16.mxu0 0
        %725 = vmatpush1.bf16.msra.mxu0 0
        %726 = vmatprep.subr.bf16.mxu0 0
        %727 = vmatpush1.bf16.msra.mxu0 0
        %728 = vmatprep.subr.bf16.mxu0 0
        %729 = vmatpush1.bf16.msra.mxu0 0
        %730 = vmatprep.subr.bf16.mxu0 0
        %731 = vmatpush1.bf16.msra.mxu0 0
        %732 = vmatprep.subr.bf16.mxu0 0
        %733 = vmatpush1.bf16.msra.mxu0 0
        %734 = vmatprep.subr.bf16.mxu0 0
        %735 = vmatpush1.bf16.msra.mxu0 0
        %736 = vmatprep.subr.bf16.mxu0 0
        %737 = vmatpush1.bf16.msra.mxu0 %v720
        %738 = vmatprep.subr.bf16.mxu0 0
        %739 = vmatpush2.bf16.msra.mxu0 0
        %740 = vmatprep.subr.bf16.mxu0 0
        %741 = vmatpush2.bf16.msra.mxu0 0
        %742 = vmatprep.subr.bf16.mxu0 0
        %743 = vmatpush2.bf16.msra.mxu0 0
        %744 = vmatprep.subr.bf16.mxu0 0
        %745 = vmatpush2.bf16.msra.mxu0 0
        %746 = vmatprep.subr.bf16.mxu0 0
        %747 = vmatpush2.bf16.msra.mxu0 0
        %748 = vmatprep.subr.bf16.mxu0 0
        %749 = vmatpush2.bf16.msra.mxu0 0
        %750 = vmatprep.subr.bf16.mxu0 0
        %751 = vmatpush2.bf16.msra.mxu0 0
        %752 = vmatprep.subr.bf16.mxu0 0
        %753 = vmatpush2.bf16.msra.mxu0 0
        %754 = vmatprep.mubr.bf16.mxu0 0
        %755 = vmatmul.mubr.bf16.gmra.mxu0 %v718
        %v756 = vpop.f32.mrf.mxu0
        %v757 = vadd.f32 0.0, %v756
        %v758 = vpop.f32.mrf.mxu0
        %v759 = vpop.f32.mrf.mxu0
        %v760 = vpop.f32.mrf.mxu0
        %761 = vdwg.mxu0
        %762 = vxpose.xlu0.c.b16.start [1/8] %v697, 128
        %763 = vxpose.xlu0.c.b16.cont [2/8] 0, 128
        %764 = vxpose.xlu0.c.b16.cont [3/8] 0, 128
        %765 = vxpose.xlu0.c.b16.cont [4/8] 0, 128
        %766 = vxpose.xlu0.c.b16.cont [5/8] 0, 128
        %767 = vxpose.xlu0.c.b16.cont [6/8] 0, 128
        %768 = vxpose.xlu0.c.b16.cont [7/8] 0, 128
        %769 = vxpose.xlu0.c.b16.end [8/8] 0, 128
        %v770 = vpop.trf.xlu0
        %v771 = vpop.trf.xlu0
        %v772 = vpop.trf.xlu0
        %v773 = vpop.trf.xlu0
        %v774 = vpop.trf.xlu0
        %v775 = vpop.trf.xlu0
        %v776 = vpop.trf.xlu0
        %v777 = vpop.trf.xlu0
        %v779 = vsel %vm340, %v770, 0
        %781 = vmatprep.subr.bf16.mxu0 0
        %782 = vmatpush1.bf16.msra.mxu0 0
        %783 = vmatprep.subr.bf16.mxu0 0
        %784 = vmatpush1.bf16.msra.mxu0 0
        %785 = vmatprep.subr.bf16.mxu0 0
        %786 = vmatpush1.bf16.msra.mxu0 0
        %787 = vmatprep.subr.bf16.mxu0 0
        %788 = vmatpush1.bf16.msra.mxu0 0
        %789 = vmatprep.subr.bf16.mxu0 0
        %790 = vmatpush1.bf16.msra.mxu0 0
        %791 = vmatprep.subr.bf16.mxu0 0
        %792 = vmatpush1.bf16.msra.mxu0 0
        %793 = vmatprep.subr.bf16.mxu0 0
        %794 = vmatpush1.bf16.msra.mxu0 0
        %795 = vmatprep.subr.bf16.mxu0 0
        %796 = vmatpush1.bf16.msra.mxu0 %v720
        %797 = vmatprep.subr.bf16.mxu0 0
        %798 = vmatpush2.bf16.msra.mxu0 0
        %799 = vmatprep.subr.bf16.mxu0 0
        %800 = vmatpush2.bf16.msra.mxu0 0
        %801 = vmatprep.subr.bf16.mxu0 0
        %802 = vmatpush2.bf16.msra.mxu0 0
        %803 = vmatprep.subr.bf16.mxu0 0
        %804 = vmatpush2.bf16.msra.mxu0 0
        %805 = vmatprep.subr.bf16.mxu0 0
        %806 = vmatpush2.bf16.msra.mxu0 0
        %807 = vmatprep.subr.bf16.mxu0 0
        %808 = vmatpush2.bf16.msra.mxu0 0
        %809 = vmatprep.subr.bf16.mxu0 0
        %810 = vmatpush2.bf16.msra.mxu0 0
        %811 = vmatprep.subr.bf16.mxu0 0
        %812 = vmatpush2.bf16.msra.mxu0 0
        %813 = vmatprep.mubr.bf16.mxu0 0
        %814 = vmatmul.mubr.bf16.gmra.mxu0 %v779
        %v815 = vpop.f32.mrf.mxu0
        %v816 = vadd.f32 %v757, %v815
        %v817 = vpop.f32.mrf.mxu0
        %v818 = vpop.f32.mrf.mxu0
        %v819 = vpop.f32.mrf.mxu0
        %820 = vdwg.mxu0
        %v822 = vsel %vm340, %v816, 0
        %824 = vmatprep.subr.mxu0 0.0
        %825 = vmatpush1.msra.mxu0 0.0
        %826 = vmatprep.subr.mxu0 0.0
        %827 = vmatpush1.msra.mxu0 0.0
        %828 = vmatprep.subr.mxu0 0.0
        %829 = vmatpush1.msra.mxu0 0.0
        %830 = vmatprep.subr.mxu0 0.0
        %831 = vmatpush1.msra.mxu0 0.0
        %832 = vmatprep.subr.mxu0 0.0
        %833 = vmatpush1.msra.mxu0 0.0
        %834 = vmatprep.subr.mxu0 0.0
        %835 = vmatpush1.msra.mxu0 0.0
        %836 = vmatprep.subr.mxu0 0.0
        %837 = vmatpush1.msra.mxu0 0.0
        %838 = vmatprep.subr.mxu0 0.0
        %839 = vmatpush1.msra.mxu0 0.0
        %840 = vmatprep.subr.mxu0 0.0
        %841 = vmatpush1.msra.mxu0 0.0
        %842 = vmatprep.subr.mxu0 0.0
        %843 = vmatpush1.msra.mxu0 0.0
        %844 = vmatprep.subr.mxu0 0.0
        %845 = vmatpush1.msra.mxu0 0.0
        %846 = vmatprep.subr.mxu0 0.0
        %847 = vmatpush1.msra.mxu0 0.0
        %848 = vmatprep.subr.mxu0 0.0
        %849 = vmatpush1.msra.mxu0 0.0
        %850 = vmatprep.subr.mxu0 0.0
        %851 = vmatpush1.msra.mxu0 0.0
        %852 = vmatprep.subr.mxu0 0.0
        %853 = vmatpush1.msra.mxu0 0.0
        %854 = vmatprep.subr.mxu0 0.0
        %855 = vmatpush1.msra.mxu0 %v589
        %856 = vmatprep.subr.mxu0 0.0
        %857 = vmatpush2.msra.mxu0 0.0
        %858 = vmatprep.subr.mxu0 0.0
        %859 = vmatpush2.msra.mxu0 0.0
        %860 = vmatprep.subr.mxu0 0.0
        %861 = vmatpush2.msra.mxu0 0.0
        %862 = vmatprep.subr.mxu0 0.0
        %863 = vmatpush2.msra.mxu0 0.0
        %864 = vmatprep.subr.mxu0 0.0
        %865 = vmatpush2.msra.mxu0 0.0
        %866 = vmatprep.subr.mxu0 0.0
        %867 = vmatpush2.msra.mxu0 0.0
        %868 = vmatprep.subr.mxu0 0.0
        %869 = vmatpush2.msra.mxu0 0.0
        %870 = vmatprep.subr.mxu0 0.0
        %871 = vmatpush2.msra.mxu0 0.0
        %872 = vmatprep.subr.mxu0 0.0
        %873 = vmatpush2.msra.mxu0 0.0
        %874 = vmatprep.subr.mxu0 0.0
        %875 = vmatpush2.msra.mxu0 0.0
        %876 = vmatprep.subr.mxu0 0.0
        %877 = vmatpush2.msra.mxu0 0.0
        %878 = vmatprep.subr.mxu0 0.0
        %879 = vmatpush2.msra.mxu0 0.0
        %880 = vmatprep.subr.mxu0 0.0
        %881 = vmatpush2.msra.mxu0 0.0
        %882 = vmatprep.subr.mxu0 0.0
        %883 = vmatpush2.msra.mxu0 0.0
        %884 = vmatprep.subr.mxu0 0.0
        %885 = vmatpush2.msra.mxu0 0.0
        %886 = vmatprep.subr.mxu0 0.0
        %887 = vmatpush2.msra.mxu0 0.0
        %888 = vmatprep.mubr.f32.mxu0 0.0
        %889 = vmatmul.mubr.f32.gmra.mxu0 %v822
        %v890 = vpop.f32.mrf.mxu0
        %v891 = vadd.f32 0.0, %v890
        %v892 = vpop.f32.mrf.mxu0
        %893 = vdwg.mxu0
        %vm894 = vcmask 27648
        %895 = vst.msk [vmem:[%s306] sm:$0xf] %vm894, %v891
        %vm896 = vcmask 7168
        %v897 = vsel %vm896, %v383, 0.0
        %898 = vadd.xlane.f32.xlu0 %v897
        %v899 = vpop.xlane.xlu0 %898
        %v900 = vrot.slane %v899, 4
        %v901 = vadd.f32 %v899, %v900
        %v902 = vrot.slane %v901, 2
        %v903 = vadd.f32 %v901, %v902
        %v904 = vrot.slane %v903, 1
        %v905 = vadd.f32 %v903, %v904
        %s906 = vtos %v905
        %v907 = vstv %s906
        %v908 = vlaneseq
        %v909 = vshrl.u32 %v908, 7
        %v910 = vlaneseq
        %v911 = vand.u32 %v910, 127
        %vm912 = vcmp.eq.s32.totalorder %v909, %v911
        %v913 = vsel %vm912, 1, 0
        %v914 = vcvt.s32.f32 %v913
        %v915 = vmul.f32 %v891, %v914
        %v916 = vsel %vm894, %v915, 0.0
        %917 = vadd.xlane.f32.xlu0 %v916
        %v918 = vpop.xlane.xlu0 %917
        %v919 = vrot.slane %v918, 4
        %v920 = vadd.f32 %v918, %v919
        %v921 = vrot.slane %v920, 2
        %v922 = vadd.f32 %v920, %v921
        %v923 = vrot.slane %v922, 1
        %v924 = vadd.f32 %v922, %v923
        %s925 = vtos %v924
        %v926 = vstv %s925
        %927 = vmatprep.subr.mxu0 0.0
        %928 = vmatpush1.msra.mxu0 0.0
        %929 = vmatprep.subr.mxu0 0.0
        %930 = vmatpush1.msra.mxu0 0.0
        %931 = vmatprep.subr.mxu0 0.0
        %932 = vmatpush1.msra.mxu0 0.0
        %933 = vmatprep.subr.mxu0 0.0
        %934 = vmatpush1.msra.mxu0 0.0
        %935 = vmatprep.subr.mxu0 0.0
        %936 = vmatpush1.msra.mxu0 0.0
        %937 = vmatprep.subr.mxu0 0.0
        %938 = vmatpush1.msra.mxu0 0.0
        %939 = vmatprep.subr.mxu0 0.0
        %940 = vmatpush1.msra.mxu0 0.0
        %941 = vmatprep.subr.mxu0 0.0
        %942 = vmatpush1.msra.mxu0 0.0
        %943 = vmatprep.subr.mxu0 0.0
        %944 = vmatpush1.msra.mxu0 0.0
        %945 = vmatprep.subr.mxu0 0.0
        %946 = vmatpush1.msra.mxu0 0.0
        %947 = vmatprep.subr.mxu0 0.0
        %948 = vmatpush1.msra.mxu0 0.0
        %949 = vmatprep.subr.mxu0 0.0
        %950 = vmatpush1.msra.mxu0 0.0
        %951 = vmatprep.subr.mxu0 0.0
        %952 = vmatpush1.msra.mxu0 0.0
        %953 = vmatprep.subr.mxu0 0.0
        %954 = vmatpush1.msra.mxu0 0.0
        %955 = vmatprep.subr.mxu0 0.0
        %956 = vmatpush1.msra.mxu0 0.0
        %957 = vmatprep.subr.mxu0 0.0
        %958 = vmatpush1.msra.mxu0 %v589
        %959 = vmatprep.subr.mxu0 0.0
        %960 = vmatpush2.msra.mxu0 0.0
        %961 = vmatprep.subr.mxu0 0.0
        %962 = vmatpush2.msra.mxu0 0.0
        %963 = vmatprep.subr.mxu0 0.0
        %964 = vmatpush2.msra.mxu0 0.0
        %965 = vmatprep.subr.mxu0 0.0
        %966 = vmatpush2.msra.mxu0 0.0
        %967 = vmatprep.subr.mxu0 0.0
        %968 = vmatpush2.msra.mxu0 0.0
        %969 = vmatprep.subr.mxu0 0.0
        %970 = vmatpush2.msra.mxu0 0.0
        %971 = vmatprep.subr.mxu0 0.0
        %972 = vmatpush2.msra.mxu0 0.0
        %973 = vmatprep.subr.mxu0 0.0
        %974 = vmatpush2.msra.mxu0 0.0
        %975 = vmatprep.subr.mxu0 0.0
        %976 = vmatpush2.msra.mxu0 0.0
        %977 = vmatprep.subr.mxu0 0.0
        %978 = vmatpush2.msra.mxu0 0.0
        %979 = vmatprep.subr.mxu0 0.0
        %980 = vmatpush2.msra.mxu0 0.0
        %981 = vmatprep.subr.mxu0 0.0
        %982 = vmatpush2.msra.mxu0 0.0
        %983 = vmatprep.subr.mxu0 0.0
        %984 = vmatpush2.msra.mxu0 0.0
        %985 = vmatprep.subr.mxu0 0.0
        %986 = vmatpush2.msra.mxu0 0.0
        %987 = vmatprep.subr.mxu0 0.0
        %988 = vmatpush2.msra.mxu0 0.0
        %989 = vmatprep.subr.mxu0 0.0
        %990 = vmatpush2.msra.mxu0 0.0
        %991 = vmatprep.mubr.f32.mxu0 0.0
        %992 = vmatmul.mubr.f32.gmra.mxu0 %v623
        %v993 = vpop.f32.mrf.mxu0
        %v994 = vadd.f32 0.0, %v993
        %v995 = vpop.f32.mrf.mxu0
        %996 = vdwg.mxu0
        %v997 = vmul.f32 %v926, 2.0
        %v998 = vsub.f32 %v907, %v997
        %v999 = vmul.f32 %v994, %v994
        %v1000 = vsel %vm894, %v999, 0.0
        %1001 = vadd.xlane.f32.xlu0 %v1000
        %v1002 = vpop.xlane.xlu0 %1001
        %v1003 = vrot.slane %v1002, 4
        %v1004 = vadd.f32 %v1002, %v1003
        %v1005 = vrot.slane %v1004, 2
        %v1006 = vadd.f32 %v1004, %v1005
        %v1007 = vrot.slane %v1006, 1
        %v1008 = vadd.f32 %v1006, %v1007
        %s1009 = vtos %v1008
        %v1010 = vstv %s1009
        %v1011 = vadd.f32 %v998, %v1010
        %v1012 = vsub.f32 0.0, %v589
        %v1013 = vadd.f32 %v589, 1e-15
        %v1014 = vlog2.pop %v1013
        %v1015 = vmul.f32 %v1014, 0.6931472
        %v1016 = vmul.f32 %v1012, %v1015
        %v1017 = vsel %vm572, %v1016, 0.0
        %1018 = vadd.xlane.f32.xlu0 %v1017
        %v1019 = vpop.xlane.xlu0 %1018
        %v1020 = vrot.slane %v1019, 4
        %v1021 = vadd.f32 %v1019, %v1020
        %v1022 = vrot.slane %v1021, 2
        %v1023 = vadd.f32 %v1021, %v1022
        %v1024 = vrot.slane %v1023, 1
        %v1025 = vadd.f32 %v1023, %v1024
        %s1026 = vtos %v1025
        %v1027 = vstv %s1026
        %vm1028 = vcmask 0
        %1029 = vst.msk [vmem:[%s312] sm:$0x1] %vm1028, %v1011
        %vm1030 = vcmask 8200
        %1031 = vst.msk [vmem:[%s312] sm:$0x1] %vm1030, %v1027
        %s1032 = sand.u32 %s153, 1
        %s1033 = scalar_lea.sflag [#allocation3], %s1032
        %s1034 = sand.u32 %s153, 1
        %s1035 = smul.addr %s1034, 4
        %s1036 = scalar_lea.vmem [#allocation2], %s1035
        %s1037 = sand.u32 %s25, 1
        %s1038 = scalar_lea.sflag [#allocation5], %s1037
        %s1039 = sand.u32 %s179, 1
        %s1040 = smul.addr %s1039, 4
        %s1041 = scalar_lea.vmem [#allocation4], %s1040
        %s1042 = sand.u32 %s25, 1
        %s1043 = scalar_lea.sflag [#allocation5], %s1042
        %s1044 = sand.u32 %s205, 1
        %s1045 = scalar_lea.vmem [#allocation6], %s1044
        // Predicated region
        $region41: #{tpu_custom_call.1} parent=39 // pred_check
          %p1046 = pneg %p163
        $region42: #{tpu_custom_call.1} parent=39 // pred_check_branch
          %1048 = sbr.rel (%p1046) target = $region44
        $region43: #{tpu_custom_call.1} parent=39 // pred_region
          %s1050 = ssub.s32 64, 64
          %1051 = vsyncadd %s1033, %s1050
          %s1052 = smul.addr %s25, 64
          %s1053 = scalar_lea.hbm %s5, %s1052
          %s1055 = sshll.u32 %s1036, 4
          %s1056 = int_to_ptr.vmem [resolvable:$true] %s1055
          %1058 = dma.vmem_to_hbm [thread:$0]  %s1056, 64, %s1053, %s1033
        $region44: #{tpu_custom_call.1} parent=39 // pred_fallthru
          _
        // Predicated region
        $region45: #{tpu_custom_call.1} parent=39 // pred_check
          %p1059 = pneg %p189
        $region46: #{tpu_custom_call.1} parent=39 // pred_check_branch
          %1061 = sbr.rel (%p1059) target = $region48
        $region47: #{tpu_custom_call.1} parent=39 // pred_region
          %s1063 = ssub.s32 64, 64
          %1064 = vsyncadd %s1038, %s1063
          %s1065 = smul.addr %s25, 64
          %s1066 = scalar_lea.hbm %s6, %s1065
          %s1068 = sshll.u32 %s1041, 4
          %s1069 = int_to_ptr.vmem [resolvable:$true] %s1068
          %1071 = dma.vmem_to_hbm [thread:$0]  %s1069, 64, %s1066, %s1038
        $region48: #{tpu_custom_call.1} parent=39 // pred_fallthru
          _
        // Predicated region
        $region49: #{tpu_custom_call.1} parent=39 // pred_check
          %p1072 = pneg %p215
        $region50: #{tpu_custom_call.1} parent=39 // pred_check_branch
          %1074 = sbr.rel (%p1072) target = $region52
        $region51: #{tpu_custom_call.1} parent=39 // pred_region
          %s1076 = ssub.s32 16, 16
          %1077 = vsyncadd %s1043, %s1076
          %s1078 = smul.addr %s25, 16
          %s1079 = scalar_lea.hbm %s7, %s1078
          %s1081 = sshll.u32 %s1045, 4
          %s1082 = int_to_ptr.vmem [resolvable:$true] %s1081
          %1084 = dma.vmem_to_hbm [thread:$0]  %s1082, 16, %s1079, %s1043
        $region52: #{tpu_custom_call.1} parent=39 // pred_fallthru
          _
      $region40: #{tpu_custom_call.1} parent=5 // pred_fallthru
        _
      %p1085 = scmp.le.s32.totalorder 2, %s20
      // Predicated region
      $region53: #{tpu_custom_call.1} parent=5 // pred_check
        %p1086 = pneg %p1085
      $region54: #{tpu_custom_call.1} parent=5 // pred_check_branch
        %1088 = sbr.rel (%p1086) target = $region56
      $region55: #{tpu_custom_call.1} parent=5 // pred_region
        %s1089 = ssub.s32 %s20, 2
        // Predicated region
        $region57: #{tpu_custom_call.1} parent=55 // pred_check
          %p1090 = pneg %p169
        $region58: #{tpu_custom_call.1} parent=55 // pred_check_branch
          %1092 = sbr.rel (%p1090) target = $region60
        $region59: #{tpu_custom_call.1} parent=55 // pred_region
          %s1093 = sand.u32 %s154, 1
          %s1094 = scalar_lea.sflag [#allocation3], %s1093
          %s1095 = sand.u32 %s154, 1
          %s1096 = smul.addr %s1095, 4
          %s1097 = scalar_lea.vmem [#allocation2], %s1096
          %1098 = dma.done %s1094, 64
        $region60: #{tpu_custom_call.1} parent=55 // pred_fallthru
          _
        // Predicated region
        $region61: #{tpu_custom_call.1} parent=55 // pred_check
          %p1099 = pneg %p195
        $region62: #{tpu_custom_call.1} parent=55 // pred_check_branch
          %1101 = sbr.rel (%p1099) target = $region64
        $region63: #{tpu_custom_call.1} parent=55 // pred_region
          %s1102 = sand.u32 %s26, 1
          %s1103 = scalar_lea.sflag [#allocation5], %s1102
          %s1104 = sand.u32 %s180, 1
          %s1105 = smul.addr %s1104, 4
          %s1106 = scalar_lea.vmem [#allocation4], %s1105
          %1107 = dma.done %s1103, 64
        $region64: #{tpu_custom_call.1} parent=55 // pred_fallthru
          _
        // Predicated region
        $region65: #{tpu_custom_call.1} parent=55 // pred_check
          %p1108 = pneg %p221
        $region66: #{tpu_custom_call.1} parent=55 // pred_check_branch
          %1110 = sbr.rel (%p1108) target = $region68
        $region67: #{tpu_custom_call.1} parent=55 // pred_region
          %s1111 = sand.u32 %s26, 1
          %s1112 = scalar_lea.sflag [#allocation5], %s1111
          %s1113 = sand.u32 %s206, 1
          %s1114 = scalar_lea.vmem [#allocation6], %s1113
          %1115 = dma.done %s1112, 16
        $region68: #{tpu_custom_call.1} parent=55 // pred_fallthru
          _
      $region56: #{tpu_custom_call.1} parent=5 // pred_fallthru
        _
    $region6: #{tpu_custom_call.1} parent=1 // loop_footer
      %s24 = sadd.s32 1, %s20
    $region7: #{tpu_custom_call.1} parent=1 // loop_footer_branch
      %19 = sbr.rel target = $region3
    $region8: #{tpu_custom_call.1} parent=1 // loop_exit
      _
    %1116 = vsyncpa [#allocation3], 1
    %s1117 = scalar_lea.sflag [#allocation3], 1
    %1118 = vsyncpa %s1117, 1
    %1119 = vsyncpa [#allocation5], 1
    %s1120 = scalar_lea.sflag [#allocation5], 1
    %1121 = vsyncpa %s1120, 1

</llo_original>
